<compile_context>
chip_gen: v7x
topology: tpu7x:2x2x1
jax: 0.10.0
libtpu: 0.0.40
codegen_flags: <defaults>
</compile_context>

<pallas_src>
import numpy as np
import jax
import jax.numpy as jnp
from jax.experimental import pallas as pl
from jax.experimental.pallas import tpu as pltpu

_LANE = 128


def _round_up(v, m):
    return (v + m - 1) // m * m


def _vmem_limit_bytes():
    """VMEM budget: ~15% headroom for Mosaic scratch / streamed-weight buffers.

    ~108 MiB on v5e/v6e (128 MiB physical), ~54 MiB on v7x (64 MiB physical).
    """
    cap = 128 * 1024 * 1024
    try:
        info = pltpu.get_tpu_info()
        cap = int(getattr(info, "vmem_capacity_bytes", cap))
    except Exception:
        pass
    return max(32 * 1024 * 1024, min(int(cap * 0.85), cap - 8 * 1024 * 1024))


# ----------------------------------------------------------------------------
# Kernel 1: fused GraphConv stack (grid axis = layer index, sequential).
# Feature-major layout: state h^T is (F, Np), adjacency is A^T[src, dst].
# ----------------------------------------------------------------------------

def fused_gconv_kernel(x_ref, a_ref, w_ref, b_ref, o_ref):
    """One grid step == one GraphConv(aggr='add') layer + ReLU.

    x_ref: (F, Np)     bf16 padded input features^T (whole-array resident VMEM,
                       read only at layer 0)
    a_ref: (Np, Np)    bf16 A^T[src, dst]            (whole-array resident VMEM)
    w_ref: (1, 2F, F)  bf16 [Wrel^T ; Wroot^T] for this layer (streamed)
    b_ref: (1, F, 1)   f32  lin_rel bias (per-sublane, lane-broadcast)
    o_ref: (F, Np)     bf16 running node state^T; constant block idx -> stays
                       resident in VMEM across layers, HBM writeback at end.
    """
    l = pl.program_id(0)

    # Layer 0: seed the resident state with the (padded) input features.
    @pl.when(l == 0)
    def _():
        o_ref[...] = x_ref[...]

    hb = o_ref[...]                       # bf16 state read directly (no f32 temp)
    F = hb.shape[0]

    # One MXU pass for both small matmuls: [Y ; ROOT] = [Wrel^T ; Wroot^T] @ h^T
    both = jnp.dot(w_ref[0], hb, preferred_element_type=jnp.float32)   # (2F, Np)
    y = both[:F].astype(jnp.bfloat16)
    root = both[F:]

    # Dominant aggregation: Y(F,Np) @ A^T(Np,Np) -> lane dim Np (MXU-wide).
    agg = jnp.dot(y, a_ref[...], preferred_element_type=jnp.float32)   # (F, Np)

    # f32 epilogue on the VPU (bias + ReLU), cast to bf16 on store.
    o_ref[...] = jnp.maximum(agg + root + b_ref[0], 0.0).astype(jnp.bfloat16)


def fused_conv_stack(xT, aT, w_s, b_s):
    nc, twoF, F = w_s.shape
    Fdim, Np = xT.shape

    def build(resident):
        if resident:
            # Single-buffered: whole array placed in VMEM once (no per-layer DMA).
            x_spec = pl.BlockSpec(memory_space=pltpu.MemorySpace.VMEM)
            a_spec = pl.BlockSpec(memory_space=pltpu.MemorySpace.VMEM)
        else:
            # Known-good fallback: constant-index blocked (double-buffered).
            x_spec = pl.BlockSpec((Fdim, Np), lambda l: (0, 0))
            a_spec = pl.BlockSpec((Np, Np), lambda l: (0, 0))
        return pl.pallas_call(
            fused_gconv_kernel,
            out_shape=jax.ShapeDtypeStruct((Fdim, Np), jnp.bfloat16),
            grid_spec=pltpu.PrefetchScalarGridSpec(
                num_scalar_prefetch=0,
                grid=(nc,),
                in_specs=[
                    x_spec,                                         # x^T (once)
                    a_spec,                                         # A^T (once)
                    pl.BlockSpec((1, twoF, F), lambda l: (l, 0, 0)),  # [Wrel;Wroot]_l
                    pl.BlockSpec((1, F, 1), lambda l: (l, 0, 0)),     # bias_l
                ],
                out_specs=pl.BlockSpec((Fdim, Np), lambda l: (0, 0)),  # resident
            ),
            compiler_params=pltpu.CompilerParams(
                dimension_semantics=("arbitrary",),   # layers are sequential
                vmem_limit_bytes=_vmem_limit_bytes(),
            ),
        )

    try:
        return build(True)(xT, aT, w_s, b_s)
    except Exception:
        return build(False)(xT, aT, w_s, b_s)


# ----------------------------------------------------------------------------
# Kernel 2: split_linear1/2 + ReLU + last_linear(cat) + sigmoid head.
# Single fused dot on x_r^T, lane-dense (1, P_pad) output.
# ----------------------------------------------------------------------------

def head_kernel(xt_ref, w_ref, sc_ref, o_ref):
    """xt_ref: (F2, Pp) bf16 x_r^T (2H zero-padded to F2, P to Pp lanes)
       w_ref:  (2, F2)  bf16 block-diagonal [w1 | 0 ; 0 | w2]
       sc_ref: (8,)     f32 SMEM scalars: [b1, b2, wl0, wl1, bl, 0, 0, 0]
       o_ref:  (1, Pp)  f32 lane-dense sigmoid output
    (out_channels == 1 is required by the original module's Linear(2, 1) head.)
    """
    acts = jnp.dot(w_ref[...], xt_ref[...],
                   preferred_element_type=jnp.float32)          # (2, Pp)
    h1 = jnp.maximum(acts[0:1, :] + sc_ref[0], 0.0)
    h2 = jnp.maximum(acts[1:2, :] + sc_ref[1], 0.0)
    # cat([h1, h2], 1) @ Wl + bl with K == 2, O == 1 -> VPU scalar FMAs.
    z = h1 * sc_ref[2] + h2 * sc_ref[3] + sc_ref[4]
    o_ref[...] = jax.nn.sigmoid(z)


def head(xrT, w12, scalars):
    F2, Pp = xrT.shape
    vmem = pl.BlockSpec(memory_space=pltpu.MemorySpace.VMEM)
    smem = pl.BlockSpec(memory_space=pltpu.MemorySpace.SMEM)
    return pl.pallas_call(
        head_kernel,
        out_shape=jax.ShapeDtypeStruct((1, Pp), jnp.float32),
        in_specs=[vmem, vmem, smem],
        out_specs=vmem,
    )(xrT, w12, scalars)


# ----------------------------------------------------------------------------
# Host-side packing / padding helpers
# ----------------------------------------------------------------------------

def _pack_conv_params(convs, F):
    """Stack per-layer ([Wrel^T ; Wroot^T], b) into (nc, 2F, F) / (nc, F, 1)."""
    nc = len(convs)
    w_s = np.zeros((nc, 2 * F, F), np.float32)
    b_s = np.zeros((nc, F, 1), np.float32)
    for l, (wrel_t, wroot_t, b) in enumerate(convs):
        cin, h = wrel_t.shape
        w_s[l, :h, :cin] = np.asarray(wrel_t).T          # Wrel^T  (out, in)
        w_s[l, F:F + h, :cin] = np.asarray(wroot_t).T    # Wroot^T (out, in)
        b_s[l, :h, 0] = np.asarray(b)[0]
    return jnp.asarray(w_s, jnp.bfloat16), jnp.asarray(b_s, jnp.float32)


# ----------------------------------------------------------------------------
# Module forward (glue in NumPy / plain JAX; hot path in Pallas)
# ----------------------------------------------------------------------------

def gconvstack_forward(x, edge_index, batch, params, hidden_channels):
    src = np.asarray(edge_index[0])
    dst = np.asarray(edge_index[1])
    N, cin = x.shape
    H = hidden_channels
    F = _round_up(max(cin, H), _LANE)       # lane-dense feature width
    Np = _round_up(N, _LANE)                # lane-aligned node count

    # Transposed dense adjacency A^T[src, dst] += 1 (GraphConv 'add');
    # bf16 is exact while per-(dst, src) edge multiplicities stay < 256.
    At = np.zeros((Np, Np), dtype=np.float32)
    np.add.at(At, (src, dst), 1.0)
    At = jnp.asarray(At, dtype=jnp.bfloat16)

    # Feature-major padded input features x^T (bf16 — matches MXU input dtype).
    xT = np.zeros((F, Np), np.float32)
    xT[:cin, :N] = np.asarray(x).T
    xT = jnp.asarray(xT, jnp.bfloat16)

    w_s, b_s = _pack_conv_params(params["convs"], F)

    # Fused conv stack: one Pallas kernel, A^T and x^T resident in VMEM.
    hT_full = fused_conv_stack(xT, At, w_s, b_s)        # (F, Np) bf16
    h = hT_full[:H, :N].T.astype(jnp.float32)           # (N, H) node-major

    # torch.unique(edge_index[0], return_counts=True); select count > 2
    # (dynamic shape -> host NumPy glue).
    a_uniq, counts = np.unique(src, return_counts=True)
    sel = a_uniq[counts > 2].astype(np.int32)
    assert sel.shape[0] % 2 == 0, \
        "selected node count must be even for the (-1, 2H) reshape"

    sel_j = jnp.asarray(sel)
    x_sel = h[sel_j]
    _ = batch[sel_j]          # selected but unused on the split=True branch

    x_r = jnp.reshape(x_sel, (-1, 2 * H))
    x1 = x_r[:, :H]
    x2 = x_r[:, H:]

    # Head: single padded x_r^T operand (lane dim = P_pad), block-diag weight.
    P = x_r.shape[0]
    F2 = _round_up(2 * H, _LANE)
    Pp = _round_up(P, _LANE)
    xrT = jnp.zeros((F2, Pp), jnp.bfloat16).at[:2 * H, :P].set(
        x_r.T.astype(jnp.bfloat16))

    w12 = np.zeros((2, F2), np.float32)
    w12[0, :H] = np.asarray(params["w1_t"])[:, 0]
    w12[1, H:2 * H] = np.asarray(params["w2_t"])[:, 0]
    w12 = jnp.asarray(w12, jnp.bfloat16)

    scalars = jnp.asarray(np.array([
        float(np.asarray(params["b1"])[0, 0]),
        float(np.asarray(params["b2"])[0, 0]),
        float(np.asarray(params["wl_t"])[0, 0]),
        float(np.asarray(params["wl_t"])[1, 0]),
        float(np.asarray(params["bl"])[0, 0]),
        0.0, 0.0, 0.0], dtype=np.float32))

    z_row = head(xrT, w12, scalars)                      # (1, Pp) lane-dense
    z = z_row[0, :P].reshape(P, 1)
    return z, [x_r, x1, x2]


# ----------------------------------------------------------------------------
# Deterministic parameter init (PyTorch-Linear-style uniform(-1/sqrt(fan_in)))
# ----------------------------------------------------------------------------

def _linear_init(key, fan_in, fan_out):
    kw, kb = jax.random.split(key)
    bound = 1.0 / np.sqrt(fan_in)
    w_t = jax.random.uniform(kw, (fan_in, fan_out), jnp.float32, -bound, bound)
    b = jax.random.uniform(kb, (1, fan_out), jnp.float32, -bound, bound)
    return w_t, b


def make_params(key, in_channels, hidden_channels, out_channels, nc):
    params = {"convs": []}
    cin = in_channels
    for _ in range(nc):
        key, k1, k2 = jax.random.split(key, 3)
        wrel_t, b = _linear_init(k1, cin, hidden_channels)
        wroot_t, _ = _linear_init(k2, cin, hidden_channels)  # lin_root: no bias
        params["convs"].append((wrel_t, wroot_t, b))
        cin = hidden_channels
    key, k1, k2, k3 = jax.random.split(key, 4)
    params["w1_t"], params["b1"] = _linear_init(k1, hidden_channels, out_channels)
    params["w2_t"], params["b2"] = _linear_init(k2, hidden_channels, out_channels)
    params["wl_t"], params["bl"] = _linear_init(k3, 2, 1)
    return params


# ----------------------------------------------------------------------------
# Pure-JAX reference (mirrors the bf16-input / f32-accumulate matmul numerics)
# ----------------------------------------------------------------------------

def reference_forward(x, edge_index, params, hidden_channels):
    src = np.asarray(edge_index[0])
    dst = np.asarray(edge_index[1])
    N = x.shape[0]
    H = hidden_channels
    A = np.zeros((N, N), dtype=np.float32)
    np.add.at(A, (dst, src), 1.0)
    A16 = jnp.asarray(A, jnp.bfloat16)

    h = x
    for (wrel, wroot, b) in params["convs"]:
        hb = h.astype(jnp.bfloat16)
        y = jnp.dot(hb, wrel.astype(jnp.bfloat16), preferred_element_type=jnp.float32)
        agg = jnp.dot(A16, y.astype(jnp.bfloat16), preferred_element_type=jnp.float32)
        root = jnp.dot(hb, wroot.astype(jnp.bfloat16), preferred_element_type=jnp.float32)
        h = jax.nn.relu(agg + root + b)

    a_uniq, counts = np.unique(src, return_counts=True)
    sel = jnp.asarray(a_uniq[counts > 2].astype(np.int32))
    x_r = jnp.reshape(h[sel], (-1, 2 * H))
    x1 = x_r[:, :H]
    x2 = x_r[:, H:]
    h1 = jax.nn.relu(jnp.dot(x1.astype(jnp.bfloat16), params["w1_t"].astype(jnp.bfloat16),
                             preferred_element_type=jnp.float32) + params["b1"])
    h2 = jax.nn.relu(jnp.dot(x2.astype(jnp.bfloat16), params["w2_t"].astype(jnp.bfloat16),
                             preferred_element_type=jnp.float32) + params["b2"])
    z = jax.nn.sigmoid(h1 * params["wl_t"][0, 0] + h2 * params["wl_t"][1, 0]
                       + params["bl"][0, 0])
    return z, [x_r, x1, x2]


# ----------------------------------------------------------------------------
# Main
# ----------------------------------------------------------------------------

if __name__ == "__main__":
    N = 16                 # nodes
    in_channels = 4
    hidden_channels = 32
    out_channels = 1       # Linear(2, 1) head requires out_channels == 1
    nc = 2

    key = jax.random.PRNGKey(0)
    key, kx = jax.random.split(key)
    x = jax.random.normal(kx, (N, in_channels), jnp.float32)

    # deterministic graph: nodes 0..7 have out-degree 3 (> 2, selected -> 8
    # nodes, even count so reshape(-1, 2H) works); nodes 8..15 out-degree 1.
    src, dst = [], []
    for i in range(8):
        for k in (1, 2, 3):
            src.append(i); dst.append((i + k) % N)
    for i in range(8, 16):
        src.append(i); dst.append((i + 1) % N)
    edge_index = np.array([src, dst], dtype=np.int32)   # (2, 32)
    batch = jnp.zeros((N,), dtype=jnp.int32)

    params = make_params(key, in_channels, hidden_channels, out_channels, nc)

    z, (x_r, x1, x2) = gconvstack_forward(x, edge_index, batch, params,
                                          hidden_channels)
    jax.block_until_ready(z)

    # verify against the bf16-mirrored pure-JAX reference (tolerance covers
    # MXU accumulation-order / bf16 state-rounding differences only).
    z_ref, (xr_ref, x1_ref, x2_ref) = reference_forward(x, edge_index, params,
                                                        hidden_channels)
    np.testing.assert_allclose(np.asarray(z), np.asarray(z_ref),
                               rtol=1e-2, atol=1e-2)
    np.testing.assert_allclose(np.asarray(x_r), np.asarray(xr_ref),
                               rtol=1e-2, atol=1e-2)
    np.testing.assert_allclose(np.asarray(x1), np.asarray(x1_ref),
                               rtol=1e-2, atol=1e-2)
    np.testing.assert_allclose(np.asarray(x2), np.asarray(x2_ref),
                               rtol=1e-2, atol=1e-2)

    print("KERNEL_OK")
</pallas_src>

<mosaic_0001>
module attributes {stable_mosaic.version = 11 : i64} {
  func.func @fused_gconv_kernel(%arg0: i32, %arg1: memref<128x128xbf16, #tpu.memory_space<vmem>>, %arg2: memref<128x128xbf16, #tpu.memory_space<vmem>>, %arg3: memref<1x256x128xbf16, #tpu.memory_space<vmem>>, %arg4: memref<1x128x1xf32, #tpu.memory_space<vmem>>, %arg5: memref<128x128xbf16, #tpu.memory_space<vmem>>) attributes {dimension_semantics = [#tpu.dimension_semantics<arbitrary>], iteration_bounds = array<i64: 2>, scalar_prefetch = 0 : i64, scratch_operands = 0 : i64, tpu.core_type = #tpu.core_type<tc>, window_params = [{pipeline_mode = #tpu.pipeline_mode<synchronous>, transform_indices = @transform_0, window_bounds = array<i64: 128, 128>}, {pipeline_mode = #tpu.pipeline_mode<synchronous>, transform_indices = @transform_1, window_bounds = array<i64: 128, 128>}, {transform_indices = @transform_2, window_bounds = array<i64: 1, 256, 128>}, {transform_indices = @transform_3, window_bounds = array<i64: 1, 128, 1>}, {pipeline_mode = #tpu.pipeline_mode<synchronous>, transform_indices = @transform_4, window_bounds = array<i64: 128, 128>}]} {
    %c0_i32 = arith.constant 0 : i32
    %0 = arith.cmpi eq, %arg0, %c0_i32 : i32
    %1 = arith.extui %0 : i1 to i32
    %c0_i32_0 = arith.constant 0 : i32
    %2 = arith.cmpi ne, %1, %c0_i32_0 : i32
    scf.if %2 {
      %c0_14 = arith.constant 0 : index
      %c0_15 = arith.constant 0 : index
      %21 = vector.load %arg1[%c0_14, %c0_15] : memref<128x128xbf16, #tpu.memory_space<vmem>>, vector<128x128xbf16>
      %c0_16 = arith.constant 0 : index
      %c0_17 = arith.constant 0 : index
      %22 = vector.load %arg5[%c0_16, %c0_17] : memref<128x128xbf16, #tpu.memory_space<vmem>>, vector<128x128xbf16>
      tpu.vector_store %arg5[%c0_16, %c0_17], %21 {strides = array<i32>} : memref<128x128xbf16, #tpu.memory_space<vmem>>, vector<128x128xbf16>,
    } else {
    }
    %c0 = arith.constant 0 : index
    %c0_1 = arith.constant 0 : index
    %3 = vector.load %arg5[%c0, %c0_1] : memref<128x128xbf16, #tpu.memory_space<vmem>>, vector<128x128xbf16>
    %c0_2 = arith.constant 0 : index
    %c0_3 = arith.constant 0 : index
    %c0_4 = arith.constant 0 : index
    %4 = vector.load %arg3[%c0_2, %c0_3, %c0_4] : memref<1x256x128xbf16, #tpu.memory_space<vmem>>, vector<1x256x128xbf16>
    %5 = vector.shape_cast %4 : vector<1x256x128xbf16> to vector<256x128xbf16>
    %cst = arith.constant dense<0.000000e+00> : vector<256x128xf32>
    %6 = tpu.matmul %5, %3, %cst {dimension_numbers = #tpu.dot_dimension_numbers<[1], [0], [0], [1], [0, 0, 1, 1], [], []>} : vector<256x128xbf16>, vector<128x128xbf16>, vector<256x128xf32> -> vector<256x128xf32>
    %7 = vector.extract_strided_slice %6 {offsets = [0, 0], sizes = [128, 128], strides = [1, 1]} : vector<256x128xf32> to vector<128x128xf32>
    %8 = arith.truncf %7 : vector<128x128xf32> to vector<128x128xbf16>
    %9 = vector.extract_strided_slice %6 {offsets = [128, 0], sizes = [128, 128], strides = [1, 1]} : vector<256x128xf32> to vector<128x128xf32>
    %c0_5 = arith.constant 0 : index
    %c0_6 = arith.constant 0 : index
    %10 = vector.load %arg2[%c0_5, %c0_6] : memref<128x128xbf16, #tpu.memory_space<vmem>>, vector<128x128xbf16>
    %cst_7 = arith.constant dense<0.000000e+00> : vector<128x128xf32>
    %11 = tpu.matmul %8, %10, %cst_7 {dimension_numbers = #tpu.dot_dimension_numbers<[1], [0], [0], [1], [0, 0, 1, 1], [], []>} : vector<128x128xbf16>, vector<128x128xbf16>, vector<128x128xf32> -> vector<128x128xf32>
    %12 = arith.addf %11, %9 : vector<128x128xf32>
    %c0_8 = arith.constant 0 : index
    %c0_9 = arith.constant 0 : index
    %c0_10 = arith.constant 0 : index
    %13 = vector.load %arg4[%c0_8, %c0_9, %c0_10] : memref<1x128x1xf32, #tpu.memory_space<vmem>>, vector<1x128x1xf32>
    %14 = vector.shape_cast %13 : vector<1x128x1xf32> to vector<128x1xf32>
    %15 = vector.broadcast %14 : vector<128x1xf32> to vector<128x128xf32>
    %16 = arith.addf %12, %15 : vector<128x128xf32>
    %cst_11 = arith.constant 0.000000e+00 : f32
    %17 = vector.broadcast %cst_11 : f32 to vector<128x128xf32>
    %18 = arith.maximumf %16, %17 : vector<128x128xf32>
    %19 = arith.truncf %18 : vector<128x128xf32> to vector<128x128xbf16>
    %c0_12 = arith.constant 0 : index
    %c0_13 = arith.constant 0 : index
    %20 = vector.load %arg5[%c0_12, %c0_13] : memref<128x128xbf16, #tpu.memory_space<vmem>>, vector<128x128xbf16>
    tpu.vector_store %arg5[%c0_12, %c0_13], %19 {strides = array<i32>} : memref<128x128xbf16, #tpu.memory_space<vmem>>, vector<128x128xbf16>,
    return
  }
  func.func @transform_0(%arg0: i32) -> (i32, i32) {
    %c0_i32 = arith.constant 0 : i32
    %c0_i32_0 = arith.constant 0 : i32
    %c0_i32_1 = arith.constant 0 : i32
    return %c0_i32, %c0_i32_0 : i32, i32
  }
  func.func @transform_1(%arg0: i32) -> (i32, i32) {
    %c0_i32 = arith.constant 0 : i32
    %c0_i32_0 = arith.constant 0 : i32
    %c0_i32_1 = arith.constant 0 : i32
    return %c0_i32, %c0_i32_0 : i32, i32
  }
  func.func @transform_2(%arg0: i32) -> (i32, i32, i32) {
    %c0_i32 = arith.constant 0 : i32
    %c0_i32_0 = arith.constant 0 : i32
    %c0_i32_1 = arith.constant 0 : i32
    return %arg0, %c0_i32, %c0_i32_0 : i32, i32, i32
  }
  func.func @transform_3(%arg0: i32) -> (i32, i32, i32) {
    %c0_i32 = arith.constant 0 : i32
    %c0_i32_0 = arith.constant 0 : i32
    %c0_i32_1 = arith.constant 0 : i32
    return %arg0, %c0_i32, %c0_i32_0 : i32, i32, i32
  }
  func.func @transform_4(%arg0: i32) -> (i32, i32) {
    %c0_i32 = arith.constant 0 : i32
    %c0_i32_0 = arith.constant 0 : i32
    %c0_i32_1 = arith.constant 0 : i32
    return %c0_i32, %c0_i32_0 : i32, i32
  }
}

module attributes {stable_mosaic.version = 11 : i64} {
  func.func @fused_gconv_kernel(%arg0: i32, %arg1: memref<128x128xbf16, #tpu.memory_space<vmem>>, %arg2: memref<128x128xbf16, #tpu.memory_space<vmem>>, %arg3: memref<1x256x128xbf16, #tpu.memory_space<vmem>>, %arg4: memref<1x128x1xf32, #tpu.memory_space<vmem>>, %arg5: memref<128x128xbf16, #tpu.memory_space<vmem>>) attributes {dimension_semantics = [#tpu.dimension_semantics<arbitrary>], iteration_bounds = array<i64: 2>, scalar_prefetch = 0 : i64, scratch_operands = 0 : i64, tpu.core_type = #tpu.core_type<tc>, window_params = [{pipeline_mode = #tpu.pipeline_mode<synchronous>, transform_indices = @transform_0, window_bounds = array<i64: 128, 128>}, {pipeline_mode = #tpu.pipeline_mode<synchronous>, transform_indices = @transform_1, window_bounds = array<i64: 128, 128>}, {transform_indices = @transform_2, window_bounds = array<i64: 1, 256, 128>}, {transform_indices = @transform_3, window_bounds = array<i64: 1, 128, 1>}, {pipeline_mode = #tpu.pipeline_mode<synchronous>, transform_indices = @transform_4, window_bounds = array<i64: 128, 128>}]} {
    %c0_i32 = arith.constant 0 : i32
    %0 = arith.cmpi eq, %arg0, %c0_i32 : i32
    %1 = arith.extui %0 : i1 to i32
    %c0_i32_0 = arith.constant 0 : i32
    %2 = arith.cmpi ne, %1, %c0_i32_0 : i32
    scf.if %2 {
      %c0_14 = arith.constant 0 : index
      %c0_15 = arith.constant 0 : index
      %21 = vector.load %arg1[%c0_14, %c0_15] : memref<128x128xbf16, #tpu.memory_space<vmem>>, vector<128x128xbf16>
      %c0_16 = arith.constant 0 : index
      %c0_17 = arith.constant 0 : index
      %22 = vector.load %arg5[%c0_16, %c0_17] : memref<128x128xbf16, #tpu.memory_space<vmem>>, vector<128x128xbf16>
      tpu.vector_store %arg5[%c0_16, %c0_17], %21 {strides = array<i32>} : memref<128x128xbf16, #tpu.memory_space<vmem>>, vector<128x128xbf16>,
    } else {
    }
    %c0 = arith.constant 0 : index
    %c0_1 = arith.constant 0 : index
    %3 = vector.load %arg5[%c0, %c0_1] : memref<128x128xbf16, #tpu.memory_space<vmem>>, vector<128x128xbf16>
    %c0_2 = arith.constant 0 : index
    %c0_3 = arith.constant 0 : index
    %c0_4 = arith.constant 0 : index
    %4 = vector.load %arg3[%c0_2, %c0_3, %c0_4] : memref<1x256x128xbf16, #tpu.memory_space<vmem>>, vector<1x256x128xbf16>
    %5 = vector.shape_cast %4 : vector<1x256x128xbf16> to vector<256x128xbf16>
    %cst = arith.constant dense<0.000000e+00> : vector<256x128xf32>
    %6 = tpu.matmul %5, %3, %cst {dimension_numbers = #tpu.dot_dimension_numbers<[1], [0], [0], [1], [0, 0, 1, 1], [], []>} : vector<256x128xbf16>, vector<128x128xbf16>, vector<256x128xf32> -> vector<256x128xf32>
    %7 = vector.extract_strided_slice %6 {offsets = [0, 0], sizes = [128, 128], strides = [1, 1]} : vector<256x128xf32> to vector<128x128xf32>
    %8 = arith.truncf %7 : vector<128x128xf32> to vector<128x128xbf16>
    %9 = vector.extract_strided_slice %6 {offsets = [128, 0], sizes = [128, 128], strides = [1, 1]} : vector<256x128xf32> to vector<128x128xf32>
    %c0_5 = arith.constant 0 : index
    %c0_6 = arith.constant 0 : index
    %10 = vector.load %arg2[%c0_5, %c0_6] : memref<128x128xbf16, #tpu.memory_space<vmem>>, vector<128x128xbf16>
    %cst_7 = arith.constant dense<0.000000e+00> : vector<128x128xf32>
    %11 = tpu.matmul %8, %10, %cst_7 {dimension_numbers = #tpu.dot_dimension_numbers<[1], [0], [0], [1], [0, 0, 1, 1], [], []>} : vector<128x128xbf16>, vector<128x128xbf16>, vector<128x128xf32> -> vector<128x128xf32>
    %12 = arith.addf %11, %9 : vector<128x128xf32>
    %c0_8 = arith.constant 0 : index
    %c0_9 = arith.constant 0 : index
    %c0_10 = arith.constant 0 : index
    %13 = vector.load %arg4[%c0_8, %c0_9, %c0_10] : memref<1x128x1xf32, #tpu.memory_space<vmem>>, vector<1x128x1xf32>
    %14 = vector.shape_cast %13 : vector<1x128x1xf32> to vector<128x1xf32>
    %15 = vector.broadcast %14 : vector<128x1xf32> to vector<128x128xf32>
    %16 = arith.addf %12, %15 : vector<128x128xf32>
    %cst_11 = arith.constant 0.000000e+00 : f32
    %17 = vector.broadcast %cst_11 : f32 to vector<128x128xf32>
    %18 = arith.maximumf %16, %17 : vector<128x128xf32>
    %19 = arith.truncf %18 : vector<128x128xf32> to vector<128x128xbf16>
    %c0_12 = arith.constant 0 : index
    %c0_13 = arith.constant 0 : index
    %20 = vector.load %arg5[%c0_12, %c0_13] : memref<128x128xbf16, #tpu.memory_space<vmem>>, vector<128x128xbf16>
    tpu.vector_store %arg5[%c0_12, %c0_13], %19 {strides = array<i32>} : memref<128x128xbf16, #tpu.memory_space<vmem>>, vector<128x128xbf16>,
    return
  }
  func.func @transform_0(%arg0: i32) -> (i32, i32) {
    %c0_i32 = arith.constant 0 : i32
    %c0_i32_0 = arith.constant 0 : i32
    %c0_i32_1 = arith.constant 0 : i32
    return %c0_i32, %c0_i32_0 : i32, i32
  }
  func.func @transform_1(%arg0: i32) -> (i32, i32) {
    %c0_i32 = arith.constant 0 : i32
    %c0_i32_0 = arith.constant 0 : i32
    %c0_i32_1 = arith.constant 0 : i32
    return %c0_i32, %c0_i32_0 : i32, i32
  }
  func.func @transform_2(%arg0: i32) -> (i32, i32, i32) {
    %c0_i32 = arith.constant 0 : i32
    %c0_i32_0 = arith.constant 0 : i32
    %c0_i32_1 = arith.constant 0 : i32
    return %arg0, %c0_i32, %c0_i32_0 : i32, i32, i32
  }
  func.func @transform_3(%arg0: i32) -> (i32, i32, i32) {
    %c0_i32 = arith.constant 0 : i32
    %c0_i32_0 = arith.constant 0 : i32
    %c0_i32_1 = arith.constant 0 : i32
    return %arg0, %c0_i32, %c0_i32_0 : i32, i32, i32
  }
  func.func @transform_4(%arg0: i32) -> (i32, i32) {
    %c0_i32 = arith.constant 0 : i32
    %c0_i32_0 = arith.constant 0 : i32
    %c0_i32_1 = arith.constant 0 : i32
    return %c0_i32, %c0_i32_0 : i32, i32
  }
}

</mosaic_0001>

<llo_original>
// kernel: tpu_custom_call.1
$region0: #{tpu_custom_call.1}
  #allocation0 [shape = 'u32[]', space=smem, size = 0x4, offset = 0x4, fixed_abs, tag = 'smem constant byte address 0x4 - core index']
  #allocation1 [shape = 'u32[144,128]{1,0:T(1,128)}', space=vmem, size = 0x12000, scoped, tag = 'internal scratch']
  %s0 = inlined_call_operand.hbm [shape: bf16[128,128], index: 0, kind: input, shape index: {}]
  %s1 = inlined_call_operand.hbm [shape: bf16[128,128], index: 1, kind: input, shape index: {}]
  %s2 = inlined_call_operand.hbm [shape: bf16[2,256,128], index: 2, kind: input, shape index: {}]
  %s3 = inlined_call_operand.hbm [shape: f32[2,128,1], index: 3, kind: input, shape index: {}]
  %s4 = inlined_call_operand.hbm [shape: bf16[128,128], index: 4, kind: output, shape index: {}]
  %s5 = sld [smem:[#allocation0]]
  $region69: #{tpu_custom_call.1} parent=0
    _
  %s7 = ssub.s32 1, %s5
  %s8 = scalar_select 0, %s7, %s5
  $region1: #{tpu_custom_call.1} parent=0
    #allocation2 [shape = 'u8[32768]{0}', space=vmem, size = 0x8000, scoped, tag = 'input window, operand 0, single buffered']
    #allocation3 [shape = 's32[2]{0}', space=sflag, size = 0x8, scoped, tag = 'scoped memory for tpu_custom_call.1']
    #allocation4 [shape = 's32[2]{0}', space=sflag, size = 0x8, scoped, tag = 'scoped memory for tpu_custom_call.1']
    #allocation5 [shape = 'u8[32768]{0}', space=vmem, size = 0x8000, scoped, tag = 'input window, operand 1, single buffered']
    #allocation6 [shape = 's32[1]{0}', space=sflag, size = 0x4, scoped, tag = 'scoped memory for tpu_custom_call.1']
    #allocation7 [shape = 'u8[131072]{0}', space=vmem, size = 0x20000, scoped, tag = 'input window, operand 2']
    #allocation8 [shape = 'u8[131072]{0}', space=vmem, size = 0x20000, scoped, tag = 'input window, operand 3']
    #allocation9 [shape = 'u8[32768]{0}', space=vmem, size = 0x8000, scoped, tag = 'output window, operand 0, single buffered']
    %9 = vsyncpa [#allocation3], 0
    %10 = vsyncpa [#allocation6], 0
    %11 = vsyncpa [#allocation4], 0
    loop: start=0, step=1, limit=4
    $region2: #{tpu_custom_call.1} parent=1 // loop_pre_header
      _
    $region3: #{tpu_custom_call.1} parent=1 // loop_header
      %s13 = sphi 0, %s17
      %p14 = scmp.ge.s32.totalorder %s13, 4
      %s21 = sphi 0, %s21
      %s23 = sphi 0, %s21
      %s24 = sphi 0, %s23
      %s38 = sphi 0, %s24
      %s42 = sphi 0, %s42
      %s44 = sphi 0, %s42
      %s45 = sphi 0, %s44
      %s59 = sphi 0, %s45
      %s65 = sphi 0, %s67
      %s68 = sphi 0, %s65
      %s69 = sphi 0, %s68
      %s85 = sphi 0, %s69
      %s91 = sphi 0, %s93
      %s94 = sphi 0, %s91
      %s95 = sphi 0, %s94
      %s111 = sphi 0, %s95
      %s115 = sphi 0, %s115
      %s117 = sphi 0, %s115
      %s118 = sphi 0, %s117
      %s132 = sphi 0, %s118
    $region4: #{tpu_custom_call.1} parent=1 // loop_header_branch
      %16 = sbr.rel (%p14) target = $region8
    $region5: #{tpu_custom_call.1} parent=1 // loop_body
      %s18 = ssub.s32 %s13, 1
      %s19 = ssub.s32 %s13, 2
      %s20 = sadd.s32 %s13, 1
      %s22 = sadd.s32 %s21, 1
      %p25 = scmp.eq.s32.totalorder %s13, 1
      %p26 = scmp.ne.s32.totalorder %s21, %s23
      %p27 = scmp.eq.s32.totalorder %s13, 0
      %p28 = por %p26, %p27
      %p29 = scmp.ne.s32.totalorder %s21, %s23
      %p30 = scmp.eq.s32.totalorder %s18, 1
      %p31 = por %p29, %p30
      %p32 = scmp.ne.s32.totalorder %s23, %s24
      %p33 = scmp.eq.s32.totalorder %s18, 0
      %p34 = por %p32, %p33
      %p35 = scmp.ne.s32.totalorder %s23, %s24
      %p36 = scmp.eq.s32.totalorder %s19, 1
      %p37 = por %p35, %p36
      %p39 = scmp.ne.s32.totalorder %s24, %s38
      %p40 = scmp.eq.s32.totalorder %s19, 0
      %p41 = por %p39, %p40
      %s43 = sadd.s32 %s42, 1
      %p46 = scmp.eq.s32.totalorder %s13, 1
      %p47 = scmp.ne.s32.totalorder %s42, %s44
      %p48 = scmp.eq.s32.totalorder %s13, 0
      %p49 = por %p47, %p48
      %p50 = scmp.ne.s32.totalorder %s42, %s44
      %p51 = scmp.eq.s32.totalorder %s18, 1
      %p52 = por %p50, %p51
      %p53 = scmp.ne.s32.totalorder %s44, %s45
      %p54 = scmp.eq.s32.totalorder %s18, 0
      %p55 = por %p53, %p54
      %p56 = scmp.ne.s32.totalorder %s44, %s45
      %p57 = scmp.eq.s32.totalorder %s19, 1
      %p58 = por %p56, %p57
      %p60 = scmp.ne.s32.totalorder %s45, %s59
      %p61 = scmp.eq.s32.totalorder %s19, 0
      %p62 = por %p60, %p61
      %s63 = ssub.s32 %s13, %s20
      %p64 = scmp.eq.s32.totalorder %s63, 0
      %s66 = sadd.s32 %s65, 1
      %s67 = scalar_select %p64, %s65, %s66
      %p70 = pneg %p64
      %p71 = scmp.eq.s32.totalorder %s13, 1
      %p72 = por %p70, %p71
      %p73 = scmp.ne.s32.totalorder %s65, %s68
      %p74 = scmp.eq.s32.totalorder %s13, 0
      %p75 = por %p73, %p74
      %p76 = scmp.ne.s32.totalorder %s65, %s68
      %p77 = scmp.eq.s32.totalorder %s18, 1
      %p78 = por %p76, %p77
      %p79 = scmp.ne.s32.totalorder %s68, %s69
      %p80 = scmp.eq.s32.totalorder %s18, 0
      %p81 = por %p79, %p80
      %p82 = scmp.ne.s32.totalorder %s68, %s69
      %p83 = scmp.eq.s32.totalorder %s19, 1
      %p84 = por %p82, %p83
      %p86 = scmp.ne.s32.totalorder %s69, %s85
      %p87 = scmp.eq.s32.totalorder %s19, 0
      %p88 = por %p86, %p87
      %s89 = ssub.s32 %s13, %s20
      %p90 = scmp.eq.s32.totalorder %s89, 0
      %s92 = sadd.s32 %s91, 1
      %s93 = scalar_select %p90, %s91, %s92
      %p96 = pneg %p90
      %p97 = scmp.eq.s32.totalorder %s13, 1
      %p98 = por %p96, %p97
      %p99 = scmp.ne.s32.totalorder %s91, %s94
      %p100 = scmp.eq.s32.totalorder %s13, 0
      %p101 = por %p99, %p100
      %p102 = scmp.ne.s32.totalorder %s91, %s94
      %p103 = scmp.eq.s32.totalorder %s18, 1
      %p104 = por %p102, %p103
      %p105 = scmp.ne.s32.totalorder %s94, %s95
      %p106 = scmp.eq.s32.totalorder %s18, 0
      %p107 = por %p105, %p106
      %p108 = scmp.ne.s32.totalorder %s94, %s95
      %p109 = scmp.eq.s32.totalorder %s19, 1
      %p110 = por %p108, %p109
      %p112 = scmp.ne.s32.totalorder %s95, %s111
      %p113 = scmp.eq.s32.totalorder %s19, 0
      %p114 = por %p112, %p113
      %s116 = sadd.s32 %s115, 1
      %p119 = scmp.eq.s32.totalorder %s13, 1
      %p120 = scmp.ne.s32.totalorder %s115, %s117
      %p121 = scmp.eq.s32.totalorder %s13, 0
      %p122 = por %p120, %p121
      %p123 = scmp.ne.s32.totalorder %s115, %s117
      %p124 = scmp.eq.s32.totalorder %s18, 1
      %p125 = por %p123, %p124
      %p126 = scmp.ne.s32.totalorder %s117, %s118
      %p127 = scmp.eq.s32.totalorder %s18, 0
      %p128 = por %p126, %p127
      %p129 = scmp.ne.s32.totalorder %s117, %s118
      %p130 = scmp.eq.s32.totalorder %s19, 1
      %p131 = por %p129, %p130
      %p133 = scmp.ne.s32.totalorder %s118, %s132
      %p134 = scmp.eq.s32.totalorder %s19, 0
      %p135 = por %p133, %p134
      %p136 = scmp.le.s32.totalorder 1, %s13
      %p137 = scmp.lt.s32.totalorder %s13, 3
      %p138 = pnand %p136, %p137
      %p139 = pneg %p138
      // Predicated region
      $region9: #{tpu_custom_call.1} parent=5 // pred_check
        _
      $region10: #{tpu_custom_call.1} parent=5 // pred_check_branch
        %141 = sbr.rel (%p138) target = $region12
      $region11: #{tpu_custom_call.1} parent=5 // pred_region
        %s142 = ssub.s32 %s13, 1
        // Predicated region
        $region13: #{tpu_custom_call.1} parent=11 // pred_check
          %p143 = pneg %p34
        $region14: #{tpu_custom_call.1} parent=11 // pred_check_branch
          %145 = sbr.rel (%p143) target = $region16
        $region15: #{tpu_custom_call.1} parent=11 // pred_region
          %s147 = ssub.s32 1024, 1024
          %148 = vsyncadd [#allocation3], %s147
          %s149 = sshll.u32 [#allocation2], 4
          %s150 = int_to_ptr.vmem [resolvable:$true] %s149
          %155 = dma.hbm_to_vmem [thread:$0]  %s0, 1024, %s150, [#allocation3], 64, 64, 4
        $region16: #{tpu_custom_call.1} parent=11 // pred_fallthru
          _
        // Predicated region
        $region17: #{tpu_custom_call.1} parent=11 // pred_check
          %p156 = pneg %p55
        $region18: #{tpu_custom_call.1} parent=11 // pred_check_branch
          %158 = sbr.rel (%p156) target = $region20
        $region19: #{tpu_custom_call.1} parent=11 // pred_region
          %s160 = ssub.s32 1024, 1024
          %161 = vsyncadd [#allocation6], %s160
          %s162 = sshll.u32 [#allocation5], 4
          %s163 = int_to_ptr.vmem [resolvable:$true] %s162
          %168 = dma.hbm_to_vmem [thread:$0]  %s1, 1024, %s163, [#allocation6], 64, 64, 4
        $region20: #{tpu_custom_call.1} parent=11 // pred_fallthru
          _
      $region12: #{tpu_custom_call.1} parent=5 // pred_fallthru
        _
      %p169 = scmp.lt.s32.totalorder %s13, 2
      // Predicated region
      $region21: #{tpu_custom_call.1} parent=5 // pred_check
        %p170 = pneg %p169
      $region22: #{tpu_custom_call.1} parent=5 // pred_check_branch
        %172 = sbr.rel (%p170) target = $region24
      $region23: #{tpu_custom_call.1} parent=5 // pred_region
        // Predicated region
        $region25: #{tpu_custom_call.1} parent=23 // pred_check
          %p173 = pneg %p75
        $region26: #{tpu_custom_call.1} parent=23 // pred_check_branch
          %175 = sbr.rel (%p173) target = $region28
        $region27: #{tpu_custom_call.1} parent=23 // pred_region
          %s176 = sand.u32 %s13, 1
          %s177 = scalar_lea.sflag [#allocation3], %s176
          %s178 = sand.u32 %s65, 1
          %s179 = smul.addr %s178, 128
          %s180 = scalar_lea.vmem [#allocation7], %s179
          %s182 = ssub.s32 2048, 2048
          %183 = vsyncadd %s177, %s182
          %s184 = smul.addr %s13, 32
          %s185 = smul.addr %s184, 64
          %s186 = scalar_lea.hbm %s2, %s185
          %s187 = sshll.u32 %s180, 4
          %s188 = int_to_ptr.vmem [resolvable:$true] %s187
          %193 = dma.hbm_to_vmem [thread:$0]  %s186, 2048, %s188, %s177, 64, 64, 4
        $region28: #{tpu_custom_call.1} parent=23 // pred_fallthru
          _
        // Predicated region
        $region29: #{tpu_custom_call.1} parent=23 // pred_check
          %p194 = pneg %p101
        $region30: #{tpu_custom_call.1} parent=23 // pred_check_branch
          %196 = sbr.rel (%p194) target = $region32
        $region31: #{tpu_custom_call.1} parent=23 // pred_region
          %s197 = sand.u32 %s13, 1
          %s198 = scalar_lea.sflag [#allocation3], %s197
          %s199 = sand.u32 %s91, 1
          %s200 = smul.addr %s199, 128
          %s201 = scalar_lea.vmem [#allocation8], %s200
          %s203 = ssub.s32 2048, 2048
          %204 = vsyncadd %s198, %s203
          %s205 = smul.addr %s13, 16
          %s206 = smul.addr %s205, 128
          %s207 = scalar_lea.hbm %s3, %s206
          %s208 = sshll.u32 %s201, 4
          %s209 = int_to_ptr.vmem [resolvable:$true] %s208
          %214 = dma.hbm_to_vmem [thread:$0]  %s207, 2048, %s209, %s198, 128, 128, 8
        $region32: #{tpu_custom_call.1} parent=23 // pred_fallthru
          _
      $region24: #{tpu_custom_call.1} parent=5 // pred_fallthru
        _
      %p215 = scmp.le.s32.totalorder 1, %s13
      %p216 = scmp.lt.s32.totalorder %s13, 3
      %p217 = pnand %p215, %p216
      %p218 = pneg %p217
      // Predicated region
      $region33: #{tpu_custom_call.1} parent=5 // pred_check
        _
      $region34: #{tpu_custom_call.1} parent=5 // pred_check_branch
        %220 = sbr.rel (%p217) target = $region36
      $region35: #{tpu_custom_call.1} parent=5 // pred_region
        %s221 = ssub.s32 %s13, 1
        // Predicated region
        $region37: #{tpu_custom_call.1} parent=35 // pred_check
          %p222 = pneg %p34
        $region38: #{tpu_custom_call.1} parent=35 // pred_check_branch
          %224 = sbr.rel (%p222) target = $region40
        $region39: #{tpu_custom_call.1} parent=35 // pred_region
          %225 = dma.done [#allocation3], 1024
        $region40: #{tpu_custom_call.1} parent=35 // pred_fallthru
          _
        // Predicated region
        $region41: #{tpu_custom_call.1} parent=35 // pred_check
          %p226 = pneg %p55
        $region42: #{tpu_custom_call.1} parent=35 // pred_check_branch
          %228 = sbr.rel (%p226) target = $region44
        $region43: #{tpu_custom_call.1} parent=35 // pred_region
          %229 = dma.done [#allocation6], 1024
        $region44: #{tpu_custom_call.1} parent=35 // pred_fallthru
          _
        %s230 = sand.u32 %s18, 1
        %s231 = scalar_lea.sflag [#allocation3], %s230
        %s232 = sand.u32 %s68, 1
        %s233 = smul.addr %s232, 128
        %s234 = scalar_lea.vmem [#allocation7], %s233
        // Predicated region
        $region45: #{tpu_custom_call.1} parent=35 // pred_check
          %p235 = pneg %p81
        $region46: #{tpu_custom_call.1} parent=35 // pred_check_branch
          %237 = sbr.rel (%p235) target = $region48
        $region47: #{tpu_custom_call.1} parent=35 // pred_region
          %238 = dma.done %s231, 2048
        $region48: #{tpu_custom_call.1} parent=35 // pred_fallthru
          _
        %s239 = sand.u32 %s18, 1
        %s240 = scalar_lea.sflag [#allocation3], %s239
        %s241 = sand.u32 %s94, 1
        %s242 = smul.addr %s241, 128
        %s243 = scalar_lea.vmem [#allocation8], %s242
        // Predicated region
        $region49: #{tpu_custom_call.1} parent=35 // pred_check
          %p244 = pneg %p107
        $region50: #{tpu_custom_call.1} parent=35 // pred_check_branch
          %246 = sbr.rel (%p244) target = $region52
        $region51: #{tpu_custom_call.1} parent=35 // pred_region
          %247 = dma.done %s240, 2048
        $region52: #{tpu_custom_call.1} parent=35 // pred_fallthru
          _
        %p248 = pneg %p34
        %p249 = pneg %p31
        %p250 = pneg %p55
        %p251 = pneg %p52
        %s252 = sand.u32 %s18, 1
        %s253 = scalar_lea.sflag [#allocation3], %s252
        %s254 = sand.u32 %s68, 1
        %s255 = smul.addr %s254, 128
        %s256 = scalar_lea.vmem [#allocation7], %s255
        %p257 = pneg %p81
        %p258 = pneg %p78
        %s259 = sand.u32 %s18, 1
        %s260 = scalar_lea.sflag [#allocation3], %s259
        %s261 = sand.u32 %s94, 1
        %s262 = smul.addr %s261, 128
        %s263 = scalar_lea.vmem [#allocation8], %s262
        %p264 = pneg %p107
        %p265 = pneg %p104
        %p266 = pneg %p128
        %p267 = pneg %p125
        %p269 = scmp.eq.s32.totalorder %s18, 0
        // Predicated region
        $region53: #{tpu_custom_call.1} parent=35 // pred_check
          %p270 = pneg %p269
        $region54: #{tpu_custom_call.1} parent=35 // pred_check_branch
          %272 = sbr.rel (%p270) target = $region56
        $region55: #{tpu_custom_call.1} parent=35 // pred_region
          %v273 = vld [vmem:[#allocation2] sm:$0xf]
          %v274 = vld [vmem:[#allocation2 + $0x4] sm:$0xf]
          %v275 = vld [vmem:[#allocation2 + $0x8] sm:$0xf]
          %v276 = vld [vmem:[#allocation2 + $0xc] sm:$0xf]
          %v277 = vld [vmem:[#allocation2 + $0x10] sm:$0xf]
          %v278 = vld [vmem:[#allocation2 + $0x14] sm:$0xf]
          %v279 = vld [vmem:[#allocation2 + $0x18] sm:$0xf]
          %v280 = vld [vmem:[#allocation2 + $0x1c] sm:$0xf]
          %v281 = vld [vmem:[#allocation2 + $0x20] sm:$0xf]
          %v282 = vld [vmem:[#allocation2 + $0x24] sm:$0xf]
          %v283 = vld [vmem:[#allocation2 + $0x28] sm:$0xf]
          %v284 = vld [vmem:[#allocation2 + $0x2c] sm:$0xf]
          %v285 = vld [vmem:[#allocation2 + $0x30] sm:$0xf]
          %v286 = vld [vmem:[#allocation2 + $0x34] sm:$0xf]
          %v287 = vld [vmem:[#allocation2 + $0x38] sm:$0xf]
          %v288 = vld [vmem:[#allocation2 + $0x3c] sm:$0xf]
          %289 = vst [vmem:[#allocation9] sm:$0xf] %v273
          %290 = vst [vmem:[#allocation9 + $0x4] sm:$0xf] %v274
          %291 = vst [vmem:[#allocation9 + $0x8] sm:$0xf] %v275
          %292 = vst [vmem:[#allocation9 + $0xc] sm:$0xf] %v276
          %293 = vst [vmem:[#allocation9 + $0x10] sm:$0xf] %v277
          %294 = vst [vmem:[#allocation9 + $0x14] sm:$0xf] %v278
          %295 = vst [vmem:[#allocation9 + $0x18] sm:$0xf] %v279
          %296 = vst [vmem:[#allocation9 + $0x1c] sm:$0xf] %v280
          %297 = vst [vmem:[#allocation9 + $0x20] sm:$0xf] %v281
          %298 = vst [vmem:[#allocation9 + $0x24] sm:$0xf] %v282
          %299 = vst [vmem:[#allocation9 + $0x28] sm:$0xf] %v283
          %300 = vst [vmem:[#allocation9 + $0x2c] sm:$0xf] %v284
          %301 = vst [vmem:[#allocation9 + $0x30] sm:$0xf] %v285
          %302 = vst [vmem:[#allocation9 + $0x34] sm:$0xf] %v286
          %303 = vst [vmem:[#allocation9 + $0x38] sm:$0xf] %v287
          %304 = vst [vmem:[#allocation9 + $0x3c] sm:$0xf] %v288
        $region56: #{tpu_custom_call.1} parent=35 // pred_fallthru
          _
        %v305 = vld [vmem:[#allocation9] sm:$0xf]
        %v306 = vld [vmem:[#allocation9 + $0x4] sm:$0xf]
        %v307 = vld [vmem:[#allocation9 + $0x8] sm:$0xf]
        %v308 = vld [vmem:[#allocation9 + $0xc] sm:$0xf]
        %v309 = vld [vmem:[#allocation9 + $0x10] sm:$0xf]
        %v310 = vld [vmem:[#allocation9 + $0x14] sm:$0xf]
        %v311 = vld [vmem:[#allocation9 + $0x18] sm:$0xf]
        %v312 = vld [vmem:[#allocation9 + $0x1c] sm:$0xf]
        %v313 = vld [vmem:[#allocation9 + $0x20] sm:$0xf]
        %v314 = vld [vmem:[#allocation9 + $0x24] sm:$0xf]
        %v315 = vld [vmem:[#allocation9 + $0x28] sm:$0xf]
        %v316 = vld [vmem:[#allocation9 + $0x2c] sm:$0xf]
        %v317 = vld [vmem:[#allocation9 + $0x30] sm:$0xf]
        %v318 = vld [vmem:[#allocation9 + $0x34] sm:$0xf]
        %v319 = vld [vmem:[#allocation9 + $0x38] sm:$0xf]
        %v320 = vld [vmem:[#allocation9 + $0x3c] sm:$0xf]
        %v321 = vld [vmem:[%s234] sm:$0xf]
        %v322 = vld [vmem:[%s234 + $0x4] sm:$0xf]
        %v323 = vld [vmem:[%s234 + $0x8] sm:$0xf]
        %v324 = vld [vmem:[%s234 + $0xc] sm:$0xf]
        %v325 = vld [vmem:[%s234 + $0x10] sm:$0xf]
        %v326 = vld [vmem:[%s234 + $0x14] sm:$0xf]
        %v327 = vld [vmem:[%s234 + $0x18] sm:$0xf]
        %v328 = vld [vmem:[%s234 + $0x1c] sm:$0xf]
        %v329 = vld [vmem:[%s234 + $0x20] sm:$0xf]
        %v330 = vld [vmem:[%s234 + $0x24] sm:$0xf]
        %v331 = vld [vmem:[%s234 + $0x28] sm:$0xf]
        %v332 = vld [vmem:[%s234 + $0x2c] sm:$0xf]
        %v333 = vld [vmem:[%s234 + $0x30] sm:$0xf]
        %v334 = vld [vmem:[%s234 + $0x34] sm:$0xf]
        %v335 = vld [vmem:[%s234 + $0x38] sm:$0xf]
        %v336 = vld [vmem:[%s234 + $0x3c] sm:$0xf]
        %v337 = vld [vmem:[%s234 + $0x40] sm:$0xf]
        %v338 = vld [vmem:[%s234 + $0x44] sm:$0xf]
        %v339 = vld [vmem:[%s234 + $0x48] sm:$0xf]
        %v340 = vld [vmem:[%s234 + $0x4c] sm:$0xf]
        %v341 = vld [vmem:[%s234 + $0x50] sm:$0xf]
        %v342 = vld [vmem:[%s234 + $0x54] sm:$0xf]
        %v343 = vld [vmem:[%s234 + $0x58] sm:$0xf]
        %v344 = vld [vmem:[%s234 + $0x5c] sm:$0xf]
        %v345 = vld [vmem:[%s234 + $0x60] sm:$0xf]
        %v346 = vld [vmem:[%s234 + $0x64] sm:$0xf]
        %v347 = vld [vmem:[%s234 + $0x68] sm:$0xf]
        %v348 = vld [vmem:[%s234 + $0x6c] sm:$0xf]
        %v349 = vld [vmem:[%s234 + $0x70] sm:$0xf]
        %v350 = vld [vmem:[%s234 + $0x74] sm:$0xf]
        %v351 = vld [vmem:[%s234 + $0x78] sm:$0xf]
        %v352 = vld [vmem:[%s234 + $0x7c] sm:$0xf]
        %v385 = vunpack.c.l.b16 %v321
        %v386 = vunpack.c.l.b16 %v322
        %v387 = vunpack.c.l.b16 %v323
        %v388 = vunpack.c.l.b16 %v324
        %v389 = vunpack.c.l.b16 %v325
        %v390 = vunpack.c.l.b16 %v326
        %v391 = vunpack.c.l.b16 %v327
        %v392 = vunpack.c.l.b16 %v328
        %v393 = vunpack.c.l.b16 %v329
        %v394 = vunpack.c.l.b16 %v330
        %v395 = vunpack.c.l.b16 %v331
        %v396 = vunpack.c.l.b16 %v332
        %v397 = vunpack.c.l.b16 %v333
        %v398 = vunpack.c.l.b16 %v334
        %v399 = vunpack.c.l.b16 %v335
        %v400 = vunpack.c.l.b16 %v336
        %v401 = vunpack.c.l.b16 %v337
        %v402 = vunpack.c.l.b16 %v338
        %v403 = vunpack.c.l.b16 %v339
        %v404 = vunpack.c.l.b16 %v340
        %v405 = vunpack.c.l.b16 %v341
        %v406 = vunpack.c.l.b16 %v342
        %v407 = vunpack.c.l.b16 %v343
        %v408 = vunpack.c.l.b16 %v344
        %v409 = vunpack.c.l.b16 %v345
        %v410 = vunpack.c.l.b16 %v346
        %v411 = vunpack.c.l.b16 %v347
        %v412 = vunpack.c.l.b16 %v348
        %v413 = vunpack.c.l.b16 %v349
        %v414 = vunpack.c.l.b16 %v350
        %v415 = vunpack.c.l.b16 %v351
        %v416 = vunpack.c.l.b16 %v352
        %v417 = vpack.c.b16 %v386, %v385
        %v418 = vpack.c.b16 %v388, %v387
        %v419 = vpack.c.b16 %v390, %v389
        %v420 = vpack.c.b16 %v392, %v391
        %v421 = vpack.c.b16 %v394, %v393
        %v422 = vpack.c.b16 %v396, %v395
        %v423 = vpack.c.b16 %v398, %v397
        %v424 = vpack.c.b16 %v400, %v399
        %v425 = vpack.c.b16 %v402, %v401
        %v426 = vpack.c.b16 %v404, %v403
        %v427 = vpack.c.b16 %v406, %v405
        %v428 = vpack.c.b16 %v408, %v407
        %v429 = vpack.c.b16 %v410, %v409
        %v430 = vpack.c.b16 %v412, %v411
        %v431 = vpack.c.b16 %v414, %v413
        %v432 = vpack.c.b16 %v416, %v415
        %v465 = vunpack.c.l.b16 %v305
        %v466 = vunpack.c.l.b16 %v306
        %v467 = vunpack.c.l.b16 %v307
        %v468 = vunpack.c.l.b16 %v308
        %v469 = vunpack.c.l.b16 %v309
        %v470 = vunpack.c.l.b16 %v310
        %v471 = vunpack.c.l.b16 %v311
        %v472 = vunpack.c.l.b16 %v312
        %v473 = vunpack.c.l.b16 %v313
        %v474 = vunpack.c.l.b16 %v314
        %v475 = vunpack.c.l.b16 %v315
        %v476 = vunpack.c.l.b16 %v316
        %v477 = vunpack.c.l.b16 %v317
        %v478 = vunpack.c.l.b16 %v318
        %v479 = vunpack.c.l.b16 %v319
        %v480 = vunpack.c.l.b16 %v320
        %v481 = vpack.c.b16 %v466, %v465
        %v482 = vpack.c.b16 %v468, %v467
        %v483 = vpack.c.b16 %v470, %v469
        %v484 = vpack.c.b16 %v472, %v471
        %v485 = vpack.c.b16 %v474, %v473
        %v486 = vpack.c.b16 %v476, %v475
        %v487 = vpack.c.b16 %v478, %v477
        %v488 = vpack.c.b16 %v480, %v479
        %497 = vmatprep.subr.bf16.mxu0 0
        %498 = vmatpush1.bf16.msra.mxu0 %v481
        %499 = vmatprep.subr.bf16.mxu0 0
        %500 = vmatpush1.bf16.msra.mxu0 %v482
        %501 = vmatprep.subr.bf16.mxu0 0
        %502 = vmatpush1.bf16.msra.mxu0 %v483
        %503 = vmatprep.subr.bf16.mxu0 0
        %504 = vmatpush1.bf16.msra.mxu0 %v484
        %505 = vmatprep.subr.bf16.mxu0 0
        %506 = vmatpush1.bf16.msra.mxu0 %v485
        %507 = vmatprep.subr.bf16.mxu0 0
        %508 = vmatpush1.bf16.msra.mxu0 %v486
        %509 = vmatprep.subr.bf16.mxu0 0
        %510 = vmatpush1.bf16.msra.mxu0 %v487
        %511 = vmatprep.subr.bf16.mxu0 0
        %512 = vmatpush1.bf16.msra.mxu0 %v488
        %513 = vmatprep.subr.bf16.mxu0 0
        %514 = vmatpush1.bf16.msra.mxu0 0
        %515 = vmatprep.subr.bf16.mxu0 0
        %516 = vmatpush1.bf16.msra.mxu0 0
        %517 = vmatprep.subr.bf16.mxu0 0
        %518 = vmatpush1.bf16.msra.mxu0 0
        %519 = vmatprep.subr.bf16.mxu0 0
        %520 = vmatpush1.bf16.msra.mxu0 0
        %521 = vmatprep.subr.bf16.mxu0 0
        %522 = vmatpush1.bf16.msra.mxu0 0
        %523 = vmatprep.subr.bf16.mxu0 0
        %524 = vmatpush1.bf16.msra.mxu0 0
        %525 = vmatprep.subr.bf16.mxu0 0
        %526 = vmatpush1.bf16.msra.mxu0 0
        %527 = vmatprep.subr.bf16.mxu0 0
        %528 = vmatpush1.bf16.msra.mxu0 0
        %529 = vmatprep.mubr.bf16.mxu0 0
        %530 = vmatmul.mubr.bf16.gmra.mrb[0].mxu0 %v417
        %v531 = vpop.f32.mrb[0].mxu0
        %v532 = vadd.f32 0.0, %v531
        %v533 = vpop.f32.mrb[0].mxu0
        %v534 = vpop.f32.mrb[0].mxu0
        %v535 = vadd.f32 0.0, %v534
        %v536 = vpop.f32.mrb[0].mxu0
        %537 = vmatprep.mubr.bf16.mxu0 0
        %538 = vmatmul.mubr.bf16.gmra.mrb[0].mxu0 %v418
        %v539 = vpop.f32.mrb[0].mxu0
        %v540 = vadd.f32 0.0, %v539
        %v541 = vpop.f32.mrb[0].mxu0
        %v542 = vpop.f32.mrb[0].mxu0
        %v543 = vadd.f32 0.0, %v542
        %v544 = vpop.f32.mrb[0].mxu0
        %545 = vmatprep.mubr.bf16.mxu0 0
        %546 = vmatmul.mubr.bf16.gmra.mrb[0].mxu0 %v419
        %v547 = vpop.f32.mrb[0].mxu0
        %v548 = vadd.f32 0.0, %v547
        %v549 = vpop.f32.mrb[0].mxu0
        %v550 = vpop.f32.mrb[0].mxu0
        %v551 = vadd.f32 0.0, %v550
        %v552 = vpop.f32.mrb[0].mxu0
        %553 = vmatprep.mubr.bf16.mxu0 0
        %554 = vmatmul.mubr.bf16.gmra.mrb[0].mxu0 %v420
        %v555 = vpop.f32.mrb[0].mxu0
        %v556 = vadd.f32 0.0, %v555
        %v557 = vpop.f32.mrb[0].mxu0
        %v558 = vpop.f32.mrb[0].mxu0
        %v559 = vadd.f32 0.0, %v558
        %v560 = vpop.f32.mrb[0].mxu0
        %561 = vmatprep.mubr.bf16.mxu0 0
        %562 = vmatmul.mubr.bf16.gmra.mrb[0].mxu0 %v421
        %v563 = vpop.f32.mrb[0].mxu0
        %v564 = vadd.f32 0.0, %v563
        %v565 = vpop.f32.mrb[0].mxu0
        %v566 = vpop.f32.mrb[0].mxu0
        %v567 = vadd.f32 0.0, %v566
        %v568 = vpop.f32.mrb[0].mxu0
        %569 = vmatprep.mubr.bf16.mxu0 0
        %570 = vmatmul.mubr.bf16.gmra.mrb[0].mxu0 %v422
        %v571 = vpop.f32.mrb[0].mxu0
        %v572 = vadd.f32 0.0, %v571
        %v573 = vpop.f32.mrb[0].mxu0
        %v574 = vpop.f32.mrb[0].mxu0
        %v575 = vadd.f32 0.0, %v574
        %v576 = vpop.f32.mrb[0].mxu0
        %577 = vmatprep.mubr.bf16.mxu0 0
        %578 = vmatmul.mubr.bf16.gmra.mrb[0].mxu0 %v423
        %v579 = vpop.f32.mrb[0].mxu0
        %v580 = vadd.f32 0.0, %v579
        %v581 = vpop.f32.mrb[0].mxu0
        %v582 = vpop.f32.mrb[0].mxu0
        %v583 = vadd.f32 0.0, %v582
        %v584 = vpop.f32.mrb[0].mxu0
        %585 = vmatprep.mubr.bf16.mxu0 0
        %586 = vmatmul.mubr.bf16.gmra.mrb[0].mxu0 %v424
        %v587 = vpop.f32.mrb[0].mxu0
        %v588 = vadd.f32 0.0, %v587
        %v589 = vpop.f32.mrb[0].mxu0
        %v590 = vpop.f32.mrb[0].mxu0
        %v591 = vadd.f32 0.0, %v590
        %v592 = vpop.f32.mrb[0].mxu0
        %593 = vmatprep.mubr.bf16.mxu0 0
        %594 = vmatmul.mubr.bf16.gmra.mrb[0].mxu0 %v425
        %v595 = vpop.f32.mrb[0].mxu0
        %v596 = vadd.f32 0.0, %v595
        %v597 = vpop.f32.mrb[0].mxu0
        %v598 = vpop.f32.mrb[0].mxu0
        %v599 = vadd.f32 0.0, %v598
        %v600 = vpop.f32.mrb[0].mxu0
        %601 = vmatprep.mubr.bf16.mxu0 0
        %602 = vmatmul.mubr.bf16.gmra.mrb[0].mxu0 %v426
        %v603 = vpop.f32.mrb[0].mxu0
        %v604 = vadd.f32 0.0, %v603
        %v605 = vpop.f32.mrb[0].mxu0
        %v606 = vpop.f32.mrb[0].mxu0
        %v607 = vadd.f32 0.0, %v606
        %v608 = vpop.f32.mrb[0].mxu0
        %609 = vmatprep.mubr.bf16.mxu0 0
        %610 = vmatmul.mubr.bf16.gmra.mrb[0].mxu0 %v427
        %v611 = vpop.f32.mrb[0].mxu0
        %v612 = vadd.f32 0.0, %v611
        %v613 = vpop.f32.mrb[0].mxu0
        %v614 = vpop.f32.mrb[0].mxu0
        %v615 = vadd.f32 0.0, %v614
        %v616 = vpop.f32.mrb[0].mxu0
        %617 = vmatprep.mubr.bf16.mxu0 0
        %618 = vmatmul.mubr.bf16.gmra.mrb[0].mxu0 %v428
        %v619 = vpop.f32.mrb[0].mxu0
        %v620 = vadd.f32 0.0, %v619
        %v621 = vpop.f32.mrb[0].mxu0
        %v622 = vpop.f32.mrb[0].mxu0
        %v623 = vadd.f32 0.0, %v622
        %v624 = vpop.f32.mrb[0].mxu0
        %625 = vmatprep.mubr.bf16.mxu0 0
        %626 = vmatmul.mubr.bf16.gmra.mrb[0].mxu0 %v429
        %v627 = vpop.f32.mrb[0].mxu0
        %v628 = vadd.f32 0.0, %v627
        %v629 = vpop.f32.mrb[0].mxu0
        %v630 = vpop.f32.mrb[0].mxu0
        %v631 = vadd.f32 0.0, %v630
        %v632 = vpop.f32.mrb[0].mxu0
        %633 = vmatprep.mubr.bf16.mxu0 0
        %634 = vmatmul.mubr.bf16.gmra.mrb[0].mxu0 %v430
        %v635 = vpop.f32.mrb[0].mxu0
        %v636 = vadd.f32 0.0, %v635
        %v637 = vpop.f32.mrb[0].mxu0
        %v638 = vpop.f32.mrb[0].mxu0
        %v639 = vadd.f32 0.0, %v638
        %v640 = vpop.f32.mrb[0].mxu0
        %641 = vmatprep.mubr.bf16.mxu0 0
        %642 = vmatmul.mubr.bf16.gmra.mrb[0].mxu0 %v431
        %v643 = vpop.f32.mrb[0].mxu0
        %v644 = vadd.f32 0.0, %v643
        %v645 = vpop.f32.mrb[0].mxu0
        %v646 = vpop.f32.mrb[0].mxu0
        %v647 = vadd.f32 0.0, %v646
        %v648 = vpop.f32.mrb[0].mxu0
        %649 = vmatprep.mubr.bf16.mxu0 0
        %650 = vmatmul.mubr.bf16.gmra.mrb[0].mxu0 %v432
        %v651 = vpop.f32.mrb[0].mxu0
        %v652 = vadd.f32 0.0, %v651
        %v653 = vpop.f32.mrb[0].mxu0
        %v654 = vpop.f32.mrb[0].mxu0
        %v655 = vadd.f32 0.0, %v654
        %v656 = vpop.f32.mrb[0].mxu0
        %657 = vdwg.mxu0
        %v658 = vpack.c.bf16 %v535, %v532
        %v659 = vpack.c.bf16 %v543, %v540
        %v660 = vpack.c.bf16 %v551, %v548
        %v661 = vpack.c.bf16 %v559, %v556
        %v662 = vpack.c.bf16 %v567, %v564
        %v663 = vpack.c.bf16 %v575, %v572
        %v664 = vpack.c.bf16 %v583, %v580
        %v665 = vpack.c.bf16 %v591, %v588
        %v666 = vld [vmem:[#allocation5] sm:$0xf]
        %v667 = vld [vmem:[#allocation5 + $0x4] sm:$0xf]
        %v668 = vld [vmem:[#allocation5 + $0x8] sm:$0xf]
        %v669 = vld [vmem:[#allocation5 + $0xc] sm:$0xf]
        %v670 = vld [vmem:[#allocation5 + $0x10] sm:$0xf]
        %v671 = vld [vmem:[#allocation5 + $0x14] sm:$0xf]
        %v672 = vld [vmem:[#allocation5 + $0x18] sm:$0xf]
        %v673 = vld [vmem:[#allocation5 + $0x1c] sm:$0xf]
        %v674 = vld [vmem:[#allocation5 + $0x20] sm:$0xf]
        %v675 = vld [vmem:[#allocation5 + $0x24] sm:$0xf]
        %v676 = vld [vmem:[#allocation5 + $0x28] sm:$0xf]
        %v677 = vld [vmem:[#allocation5 + $0x2c] sm:$0xf]
        %v678 = vld [vmem:[#allocation5 + $0x30] sm:$0xf]
        %v679 = vld [vmem:[#allocation5 + $0x34] sm:$0xf]
        %v680 = vld [vmem:[#allocation5 + $0x38] sm:$0xf]
        %v681 = vld [vmem:[#allocation5 + $0x3c] sm:$0xf]
        %v698 = vunpack.c.l.b16 %v666
        %v699 = vunpack.c.l.b16 %v667
        %v700 = vunpack.c.l.b16 %v668
        %v701 = vunpack.c.l.b16 %v669
        %v702 = vunpack.c.l.b16 %v670
        %v703 = vunpack.c.l.b16 %v671
        %v704 = vunpack.c.l.b16 %v672
        %v705 = vunpack.c.l.b16 %v673
        %v706 = vunpack.c.l.b16 %v674
        %v707 = vunpack.c.l.b16 %v675
        %v708 = vunpack.c.l.b16 %v676
        %v709 = vunpack.c.l.b16 %v677
        %v710 = vunpack.c.l.b16 %v678
        %v711 = vunpack.c.l.b16 %v679
        %v712 = vunpack.c.l.b16 %v680
        %v713 = vunpack.c.l.b16 %v681
        %v714 = vpack.c.b16 %v699, %v698
        %v715 = vpack.c.b16 %v701, %v700
        %v716 = vpack.c.b16 %v703, %v702
        %v717 = vpack.c.b16 %v705, %v704
        %v718 = vpack.c.b16 %v707, %v706
        %v719 = vpack.c.b16 %v709, %v708
        %v720 = vpack.c.b16 %v711, %v710
        %v721 = vpack.c.b16 %v713, %v712
        %730 = vmatprep.subr.bf16.mxu0 0
        %731 = vmatpush1.bf16.msra.mxu0 %v714
        %732 = vmatprep.subr.bf16.mxu0 0
        %733 = vmatpush1.bf16.msra.mxu0 %v715
        %734 = vmatprep.subr.bf16.mxu0 0
        %735 = vmatpush1.bf16.msra.mxu0 %v716
        %736 = vmatprep.subr.bf16.mxu0 0
        %737 = vmatpush1.bf16.msra.mxu0 %v717
        %738 = vmatprep.subr.bf16.mxu0 0
        %739 = vmatpush1.bf16.msra.mxu0 %v718
        %740 = vmatprep.subr.bf16.mxu0 0
        %741 = vmatpush1.bf16.msra.mxu0 %v719
        %742 = vmatprep.subr.bf16.mxu0 0
        %743 = vmatpush1.bf16.msra.mxu0 %v720
        %744 = vmatprep.subr.bf16.mxu0 0
        %745 = vmatpush1.bf16.msra.mxu0 %v721
        %746 = vmatprep.subr.bf16.mxu0 0
        %747 = vmatpush1.bf16.msra.mxu0 0
        %748 = vmatprep.subr.bf16.mxu0 0
        %749 = vmatpush1.bf16.msra.mxu0 0
        %750 = vmatprep.subr.bf16.mxu0 0
        %751 = vmatpush1.bf16.msra.mxu0 0
        %752 = vmatprep.subr.bf16.mxu0 0
        %753 = vmatpush1.bf16.msra.mxu0 0
        %754 = vmatprep.subr.bf16.mxu0 0
        %755 = vmatpush1.bf16.msra.mxu0 0
        %756 = vmatprep.subr.bf16.mxu0 0
        %757 = vmatpush1.bf16.msra.mxu0 0
        %758 = vmatprep.subr.bf16.mxu0 0
        %759 = vmatpush1.bf16.msra.mxu0 0
        %760 = vmatprep.subr.bf16.mxu0 0
        %761 = vmatpush1.bf16.msra.mxu0 0
        %762 = vmatprep.mubr.bf16.mxu0 0
        %763 = vmatmul.mubr.bf16.gmra.mrb[0].mxu0 %v658
        %v764 = vpop.f32.mrb[0].mxu0
        %v765 = vadd.f32 %v596, %v764
        %v766 = vpop.f32.mrb[0].mxu0
        %v767 = vpop.f32.mrb[0].mxu0
        %v768 = vadd.f32 %v599, %v767
        %v769 = vpop.f32.mrb[0].mxu0
        %770 = vmatprep.mubr.bf16.mxu0 0
        %771 = vmatmul.mubr.bf16.gmra.mrb[0].mxu0 %v659
        %v772 = vpop.f32.mrb[0].mxu0
        %v773 = vadd.f32 %v604, %v772
        %v774 = vpop.f32.mrb[0].mxu0
        %v775 = vpop.f32.mrb[0].mxu0
        %v776 = vadd.f32 %v607, %v775
        %v777 = vpop.f32.mrb[0].mxu0
        %778 = vmatprep.mubr.bf16.mxu0 0
        %779 = vmatmul.mubr.bf16.gmra.mrb[0].mxu0 %v660
        %v780 = vpop.f32.mrb[0].mxu0
        %v781 = vadd.f32 %v612, %v780
        %v782 = vpop.f32.mrb[0].mxu0
        %v783 = vpop.f32.mrb[0].mxu0
        %v784 = vadd.f32 %v615, %v783
        %v785 = vpop.f32.mrb[0].mxu0
        %786 = vmatprep.mubr.bf16.mxu0 0
        %787 = vmatmul.mubr.bf16.gmra.mrb[0].mxu0 %v661
        %v788 = vpop.f32.mrb[0].mxu0
        %v789 = vadd.f32 %v620, %v788
        %v790 = vpop.f32.mrb[0].mxu0
        %v791 = vpop.f32.mrb[0].mxu0
        %v792 = vadd.f32 %v623, %v791
        %v793 = vpop.f32.mrb[0].mxu0
        %794 = vmatprep.mubr.bf16.mxu0 0
        %795 = vmatmul.mubr.bf16.gmra.mrb[0].mxu0 %v662
        %v796 = vpop.f32.mrb[0].mxu0
        %v797 = vadd.f32 %v628, %v796
        %v798 = vpop.f32.mrb[0].mxu0
        %v799 = vpop.f32.mrb[0].mxu0
        %v800 = vadd.f32 %v631, %v799
        %v801 = vpop.f32.mrb[0].mxu0
        %802 = vmatprep.mubr.bf16.mxu0 0
        %803 = vmatmul.mubr.bf16.gmra.mrb[0].mxu0 %v663
        %v804 = vpop.f32.mrb[0].mxu0
        %v805 = vadd.f32 %v636, %v804
        %v806 = vpop.f32.mrb[0].mxu0
        %v807 = vpop.f32.mrb[0].mxu0
        %v808 = vadd.f32 %v639, %v807
        %v809 = vpop.f32.mrb[0].mxu0
        %810 = vmatprep.mubr.bf16.mxu0 0
        %811 = vmatmul.mubr.bf16.gmra.mrb[0].mxu0 %v664
        %v812 = vpop.f32.mrb[0].mxu0
        %v813 = vadd.f32 %v644, %v812
        %v814 = vpop.f32.mrb[0].mxu0
        %v815 = vpop.f32.mrb[0].mxu0
        %v816 = vadd.f32 %v647, %v815
        %v817 = vpop.f32.mrb[0].mxu0
        %818 = vmatprep.mubr.bf16.mxu0 0
        %819 = vmatmul.mubr.bf16.gmra.mrb[0].mxu0 %v665
        %v820 = vpop.f32.mrb[0].mxu0
        %v821 = vadd.f32 %v652, %v820
        %v822 = vpop.f32.mrb[0].mxu0
        %v823 = vpop.f32.mrb[0].mxu0
        %v824 = vadd.f32 %v655, %v823
        %v825 = vpop.f32.mrb[0].mxu0
        %826 = vdwg.mxu0
        %v827 = vld [vmem:[%s243] sm:$0xff]
        %v828 = vld [vmem:[%s243 + $0x8] sm:$0xff]
        %v829 = vld [vmem:[%s243 + $0x10] sm:$0xff]
        %v830 = vld [vmem:[%s243 + $0x18] sm:$0xff]
        %v831 = vld [vmem:[%s243 + $0x20] sm:$0xff]
        %v832 = vld [vmem:[%s243 + $0x28] sm:$0xff]
        %v833 = vld [vmem:[%s243 + $0x30] sm:$0xff]
        %v834 = vld [vmem:[%s243 + $0x38] sm:$0xff]
        %v835 = vld [vmem:[%s243 + $0x40] sm:$0xff]
        %v836 = vld [vmem:[%s243 + $0x48] sm:$0xff]
        %v837 = vld [vmem:[%s243 + $0x50] sm:$0xff]
        %v838 = vld [vmem:[%s243 + $0x58] sm:$0xff]
        %v839 = vld [vmem:[%s243 + $0x60] sm:$0xff]
        %v840 = vld [vmem:[%s243 + $0x68] sm:$0xff]
        %v841 = vld [vmem:[%s243 + $0x70] sm:$0xff]
        %v842 = vld [vmem:[%s243 + $0x78] sm:$0xff]
        %844 = vset.pattern.permute.xlu0 0
        %845 = vperm.xlu0 %844, %v827
        %v846 = vpop.permute.xlu0 %845
        %849 = vset.pattern.permute.xlu0 0
        %850 = vperm.xlu0 %849, %v828
        %v851 = vpop.permute.xlu0 %850
        %854 = vset.pattern.permute.xlu0 0
        %855 = vperm.xlu0 %854, %v829
        %v856 = vpop.permute.xlu0 %855
        %859 = vset.pattern.permute.xlu0 0
        %860 = vperm.xlu0 %859, %v830
        %v861 = vpop.permute.xlu0 %860
        %864 = vset.pattern.permute.xlu0 0
        %865 = vperm.xlu0 %864, %v831
        %v866 = vpop.permute.xlu0 %865
        %869 = vset.pattern.permute.xlu0 0
        %870 = vperm.xlu0 %869, %v832
        %v871 = vpop.permute.xlu0 %870
        %874 = vset.pattern.permute.xlu0 0
        %875 = vperm.xlu0 %874, %v833
        %v876 = vpop.permute.xlu0 %875
        %879 = vset.pattern.permute.xlu0 0
        %880 = vperm.xlu0 %879, %v834
        %v881 = vpop.permute.xlu0 %880
        %884 = vset.pattern.permute.xlu0 0
        %885 = vperm.xlu0 %884, %v835
        %v886 = vpop.permute.xlu0 %885
        %889 = vset.pattern.permute.xlu0 0
        %890 = vperm.xlu0 %889, %v836
        %v891 = vpop.permute.xlu0 %890
        %894 = vset.pattern.permute.xlu0 0
        %895 = vperm.xlu0 %894, %v837
        %v896 = vpop.permute.xlu0 %895
        %899 = vset.pattern.permute.xlu0 0
        %900 = vperm.xlu0 %899, %v838
        %v901 = vpop.permute.xlu0 %900
        %904 = vset.pattern.permute.xlu0 0
        %905 = vperm.xlu0 %904, %v839
        %v906 = vpop.permute.xlu0 %905
        %909 = vset.pattern.permute.xlu0 0
        %910 = vperm.xlu0 %909, %v840
        %v911 = vpop.permute.xlu0 %910
        %914 = vset.pattern.permute.xlu0 0
        %915 = vperm.xlu0 %914, %v841
        %v916 = vpop.permute.xlu0 %915
        %919 = vset.pattern.permute.xlu0 0
        %920 = vperm.xlu0 %919, %v842
        %v921 = vpop.permute.xlu0 %920
        %v923 = vadd.f32 %v765, %v846
        %v924 = vadd.f32 %v768, %v851
        %v925 = vadd.f32 %v773, %v856
        %v926 = vadd.f32 %v776, %v861
        %v927 = vadd.f32 %v781, %v866
        %v928 = vadd.f32 %v784, %v871
        %v929 = vadd.f32 %v789, %v876
        %v930 = vadd.f32 %v792, %v881
        %v931 = vadd.f32 %v797, %v886
        %v932 = vadd.f32 %v800, %v891
        %v933 = vadd.f32 %v805, %v896
        %v934 = vadd.f32 %v808, %v901
        %v935 = vadd.f32 %v813, %v906
        %v936 = vadd.f32 %v816, %v911
        %v937 = vadd.f32 %v821, %v916
        %v938 = vadd.f32 %v824, %v921
        %v939 = vmax.f32 %v923, 0.0
        %v940 = vmax.f32 %v924, 0.0
        %v941 = vmax.f32 %v925, 0.0
        %v942 = vmax.f32 %v926, 0.0
        %v943 = vmax.f32 %v927, 0.0
        %v944 = vmax.f32 %v928, 0.0
        %v945 = vmax.f32 %v929, 0.0
        %v946 = vmax.f32 %v930, 0.0
        %v947 = vmax.f32 %v931, 0.0
        %v948 = vmax.f32 %v932, 0.0
        %v949 = vmax.f32 %v933, 0.0
        %v950 = vmax.f32 %v934, 0.0
        %v951 = vmax.f32 %v935, 0.0
        %v952 = vmax.f32 %v936, 0.0
        %v953 = vmax.f32 %v937, 0.0
        %v954 = vmax.f32 %v938, 0.0
        %v955 = vpack.c.bf16 %v940, %v939
        %v956 = vpack.c.bf16 %v942, %v941
        %v957 = vpack.c.bf16 %v944, %v943
        %v958 = vpack.c.bf16 %v946, %v945
        %v959 = vpack.c.bf16 %v948, %v947
        %v960 = vpack.c.bf16 %v950, %v949
        %v961 = vpack.c.bf16 %v952, %v951
        %v962 = vpack.c.bf16 %v954, %v953
        %v971 = vunpack.c.l.b16 %v955
        %v972 = vunpack.c.h.b16 %v955
        %v973 = vunpack.c.l.b16 %v956
        %v974 = vunpack.c.h.b16 %v956
        %v975 = vunpack.c.l.b16 %v957
        %v976 = vunpack.c.h.b16 %v957
        %v977 = vunpack.c.l.b16 %v958
        %v978 = vunpack.c.h.b16 %v958
        %v979 = vunpack.c.l.b16 %v959
        %v980 = vunpack.c.h.b16 %v959
        %v981 = vunpack.c.l.b16 %v960
        %v982 = vunpack.c.h.b16 %v960
        %v983 = vunpack.c.l.b16 %v961
        %v984 = vunpack.c.h.b16 %v961
        %v985 = vunpack.c.l.b16 %v962
        %v986 = vunpack.c.h.b16 %v962
        %v987 = vpack.c.b16 %v971, %v971
        %v988 = vpack.c.b16 %v972, %v972
        %v989 = vpack.c.b16 %v973, %v973
        %v990 = vpack.c.b16 %v974, %v974
        %v991 = vpack.c.b16 %v975, %v975
        %v992 = vpack.c.b16 %v976, %v976
        %v993 = vpack.c.b16 %v977, %v977
        %v994 = vpack.c.b16 %v978, %v978
        %v995 = vpack.c.b16 %v979, %v979
        %v996 = vpack.c.b16 %v980, %v980
        %v997 = vpack.c.b16 %v981, %v981
        %v998 = vpack.c.b16 %v982, %v982
        %v999 = vpack.c.b16 %v983, %v983
        %v1000 = vpack.c.b16 %v984, %v984
        %v1001 = vpack.c.b16 %v985, %v985
        %v1002 = vpack.c.b16 %v986, %v986
        %1019 = vst [vmem:[#allocation9] sm:$0xf] %v987
        %1020 = vst [vmem:[#allocation9 + $0x4] sm:$0xf] %v988
        %1021 = vst [vmem:[#allocation9 + $0x8] sm:$0xf] %v989
        %1022 = vst [vmem:[#allocation9 + $0xc] sm:$0xf] %v990
        %1023 = vst [vmem:[#allocation9 + $0x10] sm:$0xf] %v991
        %1024 = vst [vmem:[#allocation9 + $0x14] sm:$0xf] %v992
        %1025 = vst [vmem:[#allocation9 + $0x18] sm:$0xf] %v993
        %1026 = vst [vmem:[#allocation9 + $0x1c] sm:$0xf] %v994
        %1027 = vst [vmem:[#allocation9 + $0x20] sm:$0xf] %v995
        %1028 = vst [vmem:[#allocation9 + $0x24] sm:$0xf] %v996
        %1029 = vst [vmem:[#allocation9 + $0x28] sm:$0xf] %v997
        %1030 = vst [vmem:[#allocation9 + $0x2c] sm:$0xf] %v998
        %1031 = vst [vmem:[#allocation9 + $0x30] sm:$0xf] %v999
        %1032 = vst [vmem:[#allocation9 + $0x34] sm:$0xf] %v1000
        %1033 = vst [vmem:[#allocation9 + $0x38] sm:$0xf] %v1001
        %1034 = vst [vmem:[#allocation9 + $0x3c] sm:$0xf] %v1002
        // Predicated region
        $region57: #{tpu_custom_call.1} parent=35 // pred_check
          %p1035 = pneg %p125
        $region58: #{tpu_custom_call.1} parent=35 // pred_check_branch
          %1037 = sbr.rel (%p1035) target = $region60
        $region59: #{tpu_custom_call.1} parent=35 // pred_region
          %s1039 = ssub.s32 1024, 1024
          %1040 = vsyncadd [#allocation4], %s1039
          %s1041 = sshll.u32 [#allocation9], 4
          %s1042 = int_to_ptr.vmem [resolvable:$true] %s1041
          %1047 = dma.vmem_to_hbm [thread:$0]  %s1042, 1024, %s4, [#allocation4], 64, 64, 4
        $region60: #{tpu_custom_call.1} parent=35 // pred_fallthru
          _
        // Predicated region
        $region61: #{tpu_custom_call.1} parent=35 // pred_check
          %p1048 = pneg %p125
        $region62: #{tpu_custom_call.1} parent=35 // pred_check_branch
          %1050 = sbr.rel (%p1048) target = $region64
        $region63: #{tpu_custom_call.1} parent=35 // pred_region
          %1051 = dma.done [#allocation4], 1024
        $region64: #{tpu_custom_call.1} parent=35 // pred_fallthru
          _
      $region36: #{tpu_custom_call.1} parent=5 // pred_fallthru
        _
      %p1052 = scmp.le.s32.totalorder 2, %s13
      // Predicated region
      $region65: #{tpu_custom_call.1} parent=5 // pred_check
        %p1053 = pneg %p1052
      $region66: #{tpu_custom_call.1} parent=5 // pred_check_branch
        %1055 = sbr.rel (%p1053) target = $region68
      $region67: #{tpu_custom_call.1} parent=5 // pred_region
        %s1056 = ssub.s32 %s13, 2
      $region68: #{tpu_custom_call.1} parent=5 // pred_fallthru
        _
    $region6: #{tpu_custom_call.1} parent=1 // loop_footer
      %s17 = sadd.s32 1, %s13
    $region7: #{tpu_custom_call.1} parent=1 // loop_footer_branch
      %12 = sbr.rel target = $region3
    $region8: #{tpu_custom_call.1} parent=1 // loop_exit
      _
    %1057 = vsyncpa [#allocation3], 1
    %s1058 = scalar_lea.sflag [#allocation3], 1
    %1059 = vsyncpa %s1058, 1
    %1060 = vsyncpa [#allocation6], 1
    %1061 = vsyncpa [#allocation4], 1
    %s1062 = scalar_lea.sflag [#allocation4], 1
    %1063 = vsyncpa %s1062, 1

// kernel: tpu_custom_call.1
$region0: #{tpu_custom_call.1}
  #allocation0 [shape = 'u32[]', space=smem, size = 0x4, offset = 0x4, fixed_abs, tag = 'smem constant byte address 0x4 - core index']
  #allocation1 [shape = 'u32[144,128]{1,0:T(1,128)}', space=vmem, size = 0x12000, scoped, tag = 'internal scratch']
  %s0 = inlined_call_operand.hbm [shape: bf16[128,128], index: 0, kind: input, shape index: {}]
  %s1 = inlined_call_operand.hbm [shape: bf16[128,128], index: 1, kind: input, shape index: {}]
  %s2 = inlined_call_operand.hbm [shape: bf16[2,256,128], index: 2, kind: input, shape index: {}]
  %s3 = inlined_call_operand.hbm [shape: f32[2,128,1], index: 3, kind: input, shape index: {}]
  %s4 = inlined_call_operand.hbm [shape: bf16[128,128], index: 4, kind: output, shape index: {}]
  %s5 = sld [smem:[#allocation0]]
  $region69: #{tpu_custom_call.1} parent=0
    _
  %s7 = ssub.s32 1, %s5
  %s8 = scalar_select 0, %s7, %s5
  $region1: #{tpu_custom_call.1} parent=0
    #allocation2 [shape = 'u8[32768]{0}', space=vmem, size = 0x8000, scoped, tag = 'input window, operand 0, single buffered']
    #allocation3 [shape = 's32[2]{0}', space=sflag, size = 0x8, scoped, tag = 'scoped memory for tpu_custom_call.1']
    #allocation4 [shape = 's32[2]{0}', space=sflag, size = 0x8, scoped, tag = 'scoped memory for tpu_custom_call.1']
    #allocation5 [shape = 'u8[32768]{0}', space=vmem, size = 0x8000, scoped, tag = 'input window, operand 1, single buffered']
    #allocation6 [shape = 's32[1]{0}', space=sflag, size = 0x4, scoped, tag = 'scoped memory for tpu_custom_call.1']
    #allocation7 [shape = 'u8[131072]{0}', space=vmem, size = 0x20000, scoped, tag = 'input window, operand 2']
    #allocation8 [shape = 'u8[131072]{0}', space=vmem, size = 0x20000, scoped, tag = 'input window, operand 3']
    #allocation9 [shape = 'u8[32768]{0}', space=vmem, size = 0x8000, scoped, tag = 'output window, operand 0, single buffered']
    %9 = vsyncpa [#allocation3], 0
    %10 = vsyncpa [#allocation6], 0
    %11 = vsyncpa [#allocation4], 0
    loop: start=0, step=1, limit=4
    $region2: #{tpu_custom_call.1} parent=1 // loop_pre_header
      _
    $region3: #{tpu_custom_call.1} parent=1 // loop_header
      %s13 = sphi 0, %s17
      %p14 = scmp.ge.s32.totalorder %s13, 4
      %s21 = sphi 0, %s21
      %s23 = sphi 0, %s21
      %s24 = sphi 0, %s23
      %s38 = sphi 0, %s24
      %s42 = sphi 0, %s42
      %s44 = sphi 0, %s42
      %s45 = sphi 0, %s44
      %s59 = sphi 0, %s45
      %s65 = sphi 0, %s67
      %s68 = sphi 0, %s65
      %s69 = sphi 0, %s68
      %s85 = sphi 0, %s69
      %s91 = sphi 0, %s93
      %s94 = sphi 0, %s91
      %s95 = sphi 0, %s94
      %s111 = sphi 0, %s95
      %s115 = sphi 0, %s115
      %s117 = sphi 0, %s115
      %s118 = sphi 0, %s117
      %s132 = sphi 0, %s118
    $region4: #{tpu_custom_call.1} parent=1 // loop_header_branch
      %16 = sbr.rel (%p14) target = $region8
    $region5: #{tpu_custom_call.1} parent=1 // loop_body
      %s18 = ssub.s32 %s13, 1
      %s19 = ssub.s32 %s13, 2
      %s20 = sadd.s32 %s13, 1
      %s22 = sadd.s32 %s21, 1
      %p25 = scmp.eq.s32.totalorder %s13, 1
      %p26 = scmp.ne.s32.totalorder %s21, %s23
      %p27 = scmp.eq.s32.totalorder %s13, 0
      %p28 = por %p26, %p27
      %p29 = scmp.ne.s32.totalorder %s21, %s23
      %p30 = scmp.eq.s32.totalorder %s18, 1
      %p31 = por %p29, %p30
      %p32 = scmp.ne.s32.totalorder %s23, %s24
      %p33 = scmp.eq.s32.totalorder %s18, 0
      %p34 = por %p32, %p33
      %p35 = scmp.ne.s32.totalorder %s23, %s24
      %p36 = scmp.eq.s32.totalorder %s19, 1
      %p37 = por %p35, %p36
      %p39 = scmp.ne.s32.totalorder %s24, %s38
      %p40 = scmp.eq.s32.totalorder %s19, 0
      %p41 = por %p39, %p40
      %s43 = sadd.s32 %s42, 1
      %p46 = scmp.eq.s32.totalorder %s13, 1
      %p47 = scmp.ne.s32.totalorder %s42, %s44
      %p48 = scmp.eq.s32.totalorder %s13, 0
      %p49 = por %p47, %p48
      %p50 = scmp.ne.s32.totalorder %s42, %s44
      %p51 = scmp.eq.s32.totalorder %s18, 1
      %p52 = por %p50, %p51
      %p53 = scmp.ne.s32.totalorder %s44, %s45
      %p54 = scmp.eq.s32.totalorder %s18, 0
      %p55 = por %p53, %p54
      %p56 = scmp.ne.s32.totalorder %s44, %s45
      %p57 = scmp.eq.s32.totalorder %s19, 1
      %p58 = por %p56, %p57
      %p60 = scmp.ne.s32.totalorder %s45, %s59
      %p61 = scmp.eq.s32.totalorder %s19, 0
      %p62 = por %p60, %p61
      %s63 = ssub.s32 %s13, %s20
      %p64 = scmp.eq.s32.totalorder %s63, 0
      %s66 = sadd.s32 %s65, 1
      %s67 = scalar_select %p64, %s65, %s66
      %p70 = pneg %p64
      %p71 = scmp.eq.s32.totalorder %s13, 1
      %p72 = por %p70, %p71
      %p73 = scmp.ne.s32.totalorder %s65, %s68
      %p74 = scmp.eq.s32.totalorder %s13, 0
      %p75 = por %p73, %p74
      %p76 = scmp.ne.s32.totalorder %s65, %s68
      %p77 = scmp.eq.s32.totalorder %s18, 1
      %p78 = por %p76, %p77
      %p79 = scmp.ne.s32.totalorder %s68, %s69
      %p80 = scmp.eq.s32.totalorder %s18, 0
      %p81 = por %p79, %p80
      %p82 = scmp.ne.s32.totalorder %s68, %s69
      %p83 = scmp.eq.s32.totalorder %s19, 1
      %p84 = por %p82, %p83
      %p86 = scmp.ne.s32.totalorder %s69, %s85
      %p87 = scmp.eq.s32.totalorder %s19, 0
      %p88 = por %p86, %p87
      %s89 = ssub.s32 %s13, %s20
      %p90 = scmp.eq.s32.totalorder %s89, 0
      %s92 = sadd.s32 %s91, 1
      %s93 = scalar_select %p90, %s91, %s92
      %p96 = pneg %p90
      %p97 = scmp.eq.s32.totalorder %s13, 1
      %p98 = por %p96, %p97
      %p99 = scmp.ne.s32.totalorder %s91, %s94
      %p100 = scmp.eq.s32.totalorder %s13, 0
      %p101 = por %p99, %p100
      %p102 = scmp.ne.s32.totalorder %s91, %s94
      %p103 = scmp.eq.s32.totalorder %s18, 1
      %p104 = por %p102, %p103
      %p105 = scmp.ne.s32.totalorder %s94, %s95
      %p106 = scmp.eq.s32.totalorder %s18, 0
      %p107 = por %p105, %p106
      %p108 = scmp.ne.s32.totalorder %s94, %s95
      %p109 = scmp.eq.s32.totalorder %s19, 1
      %p110 = por %p108, %p109
      %p112 = scmp.ne.s32.totalorder %s95, %s111
      %p113 = scmp.eq.s32.totalorder %s19, 0
      %p114 = por %p112, %p113
      %s116 = sadd.s32 %s115, 1
      %p119 = scmp.eq.s32.totalorder %s13, 1
      %p120 = scmp.ne.s32.totalorder %s115, %s117
      %p121 = scmp.eq.s32.totalorder %s13, 0
      %p122 = por %p120, %p121
      %p123 = scmp.ne.s32.totalorder %s115, %s117
      %p124 = scmp.eq.s32.totalorder %s18, 1
      %p125 = por %p123, %p124
      %p126 = scmp.ne.s32.totalorder %s117, %s118
      %p127 = scmp.eq.s32.totalorder %s18, 0
      %p128 = por %p126, %p127
      %p129 = scmp.ne.s32.totalorder %s117, %s118
      %p130 = scmp.eq.s32.totalorder %s19, 1
      %p131 = por %p129, %p130
      %p133 = scmp.ne.s32.totalorder %s118, %s132
      %p134 = scmp.eq.s32.totalorder %s19, 0
      %p135 = por %p133, %p134
      %p136 = scmp.le.s32.totalorder 1, %s13
      %p137 = scmp.lt.s32.totalorder %s13, 3
      %p138 = pnand %p136, %p137
      %p139 = pneg %p138
      // Predicated region
      $region9: #{tpu_custom_call.1} parent=5 // pred_check
        _
      $region10: #{tpu_custom_call.1} parent=5 // pred_check_branch
        %141 = sbr.rel (%p138) target = $region12
      $region11: #{tpu_custom_call.1} parent=5 // pred_region
        %s142 = ssub.s32 %s13, 1
        // Predicated region
        $region13: #{tpu_custom_call.1} parent=11 // pred_check
          %p143 = pneg %p34
        $region14: #{tpu_custom_call.1} parent=11 // pred_check_branch
          %145 = sbr.rel (%p143) target = $region16
        $region15: #{tpu_custom_call.1} parent=11 // pred_region
          %s147 = ssub.s32 1024, 1024
          %148 = vsyncadd [#allocation3], %s147
          %s149 = sshll.u32 [#allocation2], 4
          %s150 = int_to_ptr.vmem [resolvable:$true] %s149
          %155 = dma.hbm_to_vmem [thread:$0]  %s0, 1024, %s150, [#allocation3], 64, 64, 4
        $region16: #{tpu_custom_call.1} parent=11 // pred_fallthru
          _
        // Predicated region
        $region17: #{tpu_custom_call.1} parent=11 // pred_check
          %p156 = pneg %p55
        $region18: #{tpu_custom_call.1} parent=11 // pred_check_branch
          %158 = sbr.rel (%p156) target = $region20
        $region19: #{tpu_custom_call.1} parent=11 // pred_region
          %s160 = ssub.s32 1024, 1024
          %161 = vsyncadd [#allocation6], %s160
          %s162 = sshll.u32 [#allocation5], 4
          %s163 = int_to_ptr.vmem [resolvable:$true] %s162
          %168 = dma.hbm_to_vmem [thread:$0]  %s1, 1024, %s163, [#allocation6], 64, 64, 4
        $region20: #{tpu_custom_call.1} parent=11 // pred_fallthru
          _
      $region12: #{tpu_custom_call.1} parent=5 // pred_fallthru
        _
      %p169 = scmp.lt.s32.totalorder %s13, 2
      // Predicated region
      $region21: #{tpu_custom_call.1} parent=5 // pred_check
        %p170 = pneg %p169
      $region22: #{tpu_custom_call.1} parent=5 // pred_check_branch
        %172 = sbr.rel (%p170) target = $region24
      $region23: #{tpu_custom_call.1} parent=5 // pred_region
        // Predicated region
        $region25: #{tpu_custom_call.1} parent=23 // pred_check
          %p173 = pneg %p75
        $region26: #{tpu_custom_call.1} parent=23 // pred_check_branch
          %175 = sbr.rel (%p173) target = $region28
        $region27: #{tpu_custom_call.1} parent=23 // pred_region
          %s176 = sand.u32 %s13, 1
          %s177 = scalar_lea.sflag [#allocation3], %s176
          %s178 = sand.u32 %s65, 1
          %s179 = smul.addr %s178, 128
          %s180 = scalar_lea.vmem [#allocation7], %s179
          %s182 = ssub.s32 2048, 2048
          %183 = vsyncadd %s177, %s182
          %s184 = smul.addr %s13, 32
          %s185 = smul.addr %s184, 64
          %s186 = scalar_lea.hbm %s2, %s185
          %s187 = sshll.u32 %s180, 4
          %s188 = int_to_ptr.vmem [resolvable:$true] %s187
          %193 = dma.hbm_to_vmem [thread:$0]  %s186, 2048, %s188, %s177, 64, 64, 4
        $region28: #{tpu_custom_call.1} parent=23 // pred_fallthru
          _
        // Predicated region
        $region29: #{tpu_custom_call.1} parent=23 // pred_check
          %p194 = pneg %p101
        $region30: #{tpu_custom_call.1} parent=23 // pred_check_branch
          %196 = sbr.rel (%p194) target = $region32
        $region31: #{tpu_custom_call.1} parent=23 // pred_region
          %s197 = sand.u32 %s13, 1
          %s198 = scalar_lea.sflag [#allocation3], %s197
          %s199 = sand.u32 %s91, 1
          %s200 = smul.addr %s199, 128
          %s201 = scalar_lea.vmem [#allocation8], %s200
          %s203 = ssub.s32 2048, 2048
          %204 = vsyncadd %s198, %s203
          %s205 = smul.addr %s13, 16
          %s206 = smul.addr %s205, 128
          %s207 = scalar_lea.hbm %s3, %s206
          %s208 = sshll.u32 %s201, 4
          %s209 = int_to_ptr.vmem [resolvable:$true] %s208
          %214 = dma.hbm_to_vmem [thread:$0]  %s207, 2048, %s209, %s198, 128, 128, 8
        $region32: #{tpu_custom_call.1} parent=23 // pred_fallthru
          _
      $region24: #{tpu_custom_call.1} parent=5 // pred_fallthru
        _
      %p215 = scmp.le.s32.totalorder 1, %s13
      %p216 = scmp.lt.s32.totalorder %s13, 3
      %p217 = pnand %p215, %p216
      %p218 = pneg %p217
      // Predicated region
      $region33: #{tpu_custom_call.1} parent=5 // pred_check
        _
      $region34: #{tpu_custom_call.1} parent=5 // pred_check_branch
        %220 = sbr.rel (%p217) target = $region36
      $region35: #{tpu_custom_call.1} parent=5 // pred_region
        %s221 = ssub.s32 %s13, 1
        // Predicated region
        $region37: #{tpu_custom_call.1} parent=35 // pred_check
          %p222 = pneg %p34
        $region38: #{tpu_custom_call.1} parent=35 // pred_check_branch
          %224 = sbr.rel (%p222) target = $region40
        $region39: #{tpu_custom_call.1} parent=35 // pred_region
          %225 = dma.done [#allocation3], 1024
        $region40: #{tpu_custom_call.1} parent=35 // pred_fallthru
          _
        // Predicated region
        $region41: #{tpu_custom_call.1} parent=35 // pred_check
          %p226 = pneg %p55
        $region42: #{tpu_custom_call.1} parent=35 // pred_check_branch
          %228 = sbr.rel (%p226) target = $region44
        $region43: #{tpu_custom_call.1} parent=35 // pred_region
          %229 = dma.done [#allocation6], 1024
        $region44: #{tpu_custom_call.1} parent=35 // pred_fallthru
          _
        %s230 = sand.u32 %s18, 1
        %s231 = scalar_lea.sflag [#allocation3], %s230
        %s232 = sand.u32 %s68, 1
        %s233 = smul.addr %s232, 128
        %s234 = scalar_lea.vmem [#allocation7], %s233
        // Predicated region
        $region45: #{tpu_custom_call.1} parent=35 // pred_check
          %p235 = pneg %p81
        $region46: #{tpu_custom_call.1} parent=35 // pred_check_branch
          %237 = sbr.rel (%p235) target = $region48
        $region47: #{tpu_custom_call.1} parent=35 // pred_region
          %238 = dma.done %s231, 2048
        $region48: #{tpu_custom_call.1} parent=35 // pred_fallthru
          _
        %s239 = sand.u32 %s18, 1
        %s240 = scalar_lea.sflag [#allocation3], %s239
        %s241 = sand.u32 %s94, 1
        %s242 = smul.addr %s241, 128
        %s243 = scalar_lea.vmem [#allocation8], %s242
        // Predicated region
        $region49: #{tpu_custom_call.1} parent=35 // pred_check
          %p244 = pneg %p107
        $region50: #{tpu_custom_call.1} parent=35 // pred_check_branch
          %246 = sbr.rel (%p244) target = $region52
        $region51: #{tpu_custom_call.1} parent=35 // pred_region
          %247 = dma.done %s240, 2048
        $region52: #{tpu_custom_call.1} parent=35 // pred_fallthru
          _
        %p248 = pneg %p34
        %p249 = pneg %p31
        %p250 = pneg %p55
        %p251 = pneg %p52
        %s252 = sand.u32 %s18, 1
        %s253 = scalar_lea.sflag [#allocation3], %s252
        %s254 = sand.u32 %s68, 1
        %s255 = smul.addr %s254, 128
        %s256 = scalar_lea.vmem [#allocation7], %s255
        %p257 = pneg %p81
        %p258 = pneg %p78
        %s259 = sand.u32 %s18, 1
        %s260 = scalar_lea.sflag [#allocation3], %s259
        %s261 = sand.u32 %s94, 1
        %s262 = smul.addr %s261, 128
        %s263 = scalar_lea.vmem [#allocation8], %s262
        %p264 = pneg %p107
        %p265 = pneg %p104
        %p266 = pneg %p128
        %p267 = pneg %p125
        %p269 = scmp.eq.s32.totalorder %s18, 0
        // Predicated region
        $region53: #{tpu_custom_call.1} parent=35 // pred_check
          %p270 = pneg %p269
        $region54: #{tpu_custom_call.1} parent=35 // pred_check_branch
          %272 = sbr.rel (%p270) target = $region56
        $region55: #{tpu_custom_call.1} parent=35 // pred_region
          %v273 = vld [vmem:[#allocation2] sm:$0xf]
          %v274 = vld [vmem:[#allocation2 + $0x4] sm:$0xf]
          %v275 = vld [vmem:[#allocation2 + $0x8] sm:$0xf]
          %v276 = vld [vmem:[#allocation2 + $0xc] sm:$0xf]
          %v277 = vld [vmem:[#allocation2 + $0x10] sm:$0xf]
          %v278 = vld [vmem:[#allocation2 + $0x14] sm:$0xf]
          %v279 = vld [vmem:[#allocation2 + $0x18] sm:$0xf]
          %v280 = vld [vmem:[#allocation2 + $0x1c] sm:$0xf]
          %v281 = vld [vmem:[#allocation2 + $0x20] sm:$0xf]
          %v282 = vld [vmem:[#allocation2 + $0x24] sm:$0xf]
          %v283 = vld [vmem:[#allocation2 + $0x28] sm:$0xf]
          %v284 = vld [vmem:[#allocation2 + $0x2c] sm:$0xf]
          %v285 = vld [vmem:[#allocation2 + $0x30] sm:$0xf]
          %v286 = vld [vmem:[#allocation2 + $0x34] sm:$0xf]
          %v287 = vld [vmem:[#allocation2 + $0x38] sm:$0xf]
          %v288 = vld [vmem:[#allocation2 + $0x3c] sm:$0xf]
          %289 = vst [vmem:[#allocation9] sm:$0xf] %v273
          %290 = vst [vmem:[#allocation9 + $0x4] sm:$0xf] %v274
          %291 = vst [vmem:[#allocation9 + $0x8] sm:$0xf] %v275
          %292 = vst [vmem:[#allocation9 + $0xc] sm:$0xf] %v276
          %293 = vst [vmem:[#allocation9 + $0x10] sm:$0xf] %v277
          %294 = vst [vmem:[#allocation9 + $0x14] sm:$0xf] %v278
          %295 = vst [vmem:[#allocation9 + $0x18] sm:$0xf] %v279
          %296 = vst [vmem:[#allocation9 + $0x1c] sm:$0xf] %v280
          %297 = vst [vmem:[#allocation9 + $0x20] sm:$0xf] %v281
          %298 = vst [vmem:[#allocation9 + $0x24] sm:$0xf] %v282
          %299 = vst [vmem:[#allocation9 + $0x28] sm:$0xf] %v283
          %300 = vst [vmem:[#allocation9 + $0x2c] sm:$0xf] %v284
          %301 = vst [vmem:[#allocation9 + $0x30] sm:$0xf] %v285
          %302 = vst [vmem:[#allocation9 + $0x34] sm:$0xf] %v286
          %303 = vst [vmem:[#allocation9 + $0x38] sm:$0xf] %v287
          %304 = vst [vmem:[#allocation9 + $0x3c] sm:$0xf] %v288
        $region56: #{tpu_custom_call.1} parent=35 // pred_fallthru
          _
        %v305 = vld [vmem:[#allocation9] sm:$0xf]
        %v306 = vld [vmem:[#allocation9 + $0x4] sm:$0xf]
        %v307 = vld [vmem:[#allocation9 + $0x8] sm:$0xf]
        %v308 = vld [vmem:[#allocation9 + $0xc] sm:$0xf]
        %v309 = vld [vmem:[#allocation9 + $0x10] sm:$0xf]
        %v310 = vld [vmem:[#allocation9 + $0x14] sm:$0xf]
        %v311 = vld [vmem:[#allocation9 + $0x18] sm:$0xf]
        %v312 = vld [vmem:[#allocation9 + $0x1c] sm:$0xf]
        %v313 = vld [vmem:[#allocation9 + $0x20] sm:$0xf]
        %v314 = vld [vmem:[#allocation9 + $0x24] sm:$0xf]
        %v315 = vld [vmem:[#allocation9 + $0x28] sm:$0xf]
        %v316 = vld [vmem:[#allocation9 + $0x2c] sm:$0xf]
        %v317 = vld [vmem:[#allocation9 + $0x30] sm:$0xf]
        %v318 = vld [vmem:[#allocation9 + $0x34] sm:$0xf]
        %v319 = vld [vmem:[#allocation9 + $0x38] sm:$0xf]
        %v320 = vld [vmem:[#allocation9 + $0x3c] sm:$0xf]
        %v321 = vld [vmem:[%s234] sm:$0xf]
        %v322 = vld [vmem:[%s234 + $0x4] sm:$0xf]
        %v323 = vld [vmem:[%s234 + $0x8] sm:$0xf]
        %v324 = vld [vmem:[%s234 + $0xc] sm:$0xf]
        %v325 = vld [vmem:[%s234 + $0x10] sm:$0xf]
        %v326 = vld [vmem:[%s234 + $0x14] sm:$0xf]
        %v327 = vld [vmem:[%s234 + $0x18] sm:$0xf]
        %v328 = vld [vmem:[%s234 + $0x1c] sm:$0xf]
        %v329 = vld [vmem:[%s234 + $0x20] sm:$0xf]
        %v330 = vld [vmem:[%s234 + $0x24] sm:$0xf]
        %v331 = vld [vmem:[%s234 + $0x28] sm:$0xf]
        %v332 = vld [vmem:[%s234 + $0x2c] sm:$0xf]
        %v333 = vld [vmem:[%s234 + $0x30] sm:$0xf]
        %v334 = vld [vmem:[%s234 + $0x34] sm:$0xf]
        %v335 = vld [vmem:[%s234 + $0x38] sm:$0xf]
        %v336 = vld [vmem:[%s234 + $0x3c] sm:$0xf]
        %v337 = vld [vmem:[%s234 + $0x40] sm:$0xf]
        %v338 = vld [vmem:[%s234 + $0x44] sm:$0xf]
        %v339 = vld [vmem:[%s234 + $0x48] sm:$0xf]
        %v340 = vld [vmem:[%s234 + $0x4c] sm:$0xf]
        %v341 = vld [vmem:[%s234 + $0x50] sm:$0xf]
        %v342 = vld [vmem:[%s234 + $0x54] sm:$0xf]
        %v343 = vld [vmem:[%s234 + $0x58] sm:$0xf]
        %v344 = vld [vmem:[%s234 + $0x5c] sm:$0xf]
        %v345 = vld [vmem:[%s234 + $0x60] sm:$0xf]
        %v346 = vld [vmem:[%s234 + $0x64] sm:$0xf]
        %v347 = vld [vmem:[%s234 + $0x68] sm:$0xf]
        %v348 = vld [vmem:[%s234 + $0x6c] sm:$0xf]
        %v349 = vld [vmem:[%s234 + $0x70] sm:$0xf]
        %v350 = vld [vmem:[%s234 + $0x74] sm:$0xf]
        %v351 = vld [vmem:[%s234 + $0x78] sm:$0xf]
        %v352 = vld [vmem:[%s234 + $0x7c] sm:$0xf]
        %v385 = vunpack.c.l.b16 %v321
        %v386 = vunpack.c.l.b16 %v322
        %v387 = vunpack.c.l.b16 %v323
        %v388 = vunpack.c.l.b16 %v324
        %v389 = vunpack.c.l.b16 %v325
        %v390 = vunpack.c.l.b16 %v326
        %v391 = vunpack.c.l.b16 %v327
        %v392 = vunpack.c.l.b16 %v328
        %v393 = vunpack.c.l.b16 %v329
        %v394 = vunpack.c.l.b16 %v330
        %v395 = vunpack.c.l.b16 %v331
        %v396 = vunpack.c.l.b16 %v332
        %v397 = vunpack.c.l.b16 %v333
        %v398 = vunpack.c.l.b16 %v334
        %v399 = vunpack.c.l.b16 %v335
        %v400 = vunpack.c.l.b16 %v336
        %v401 = vunpack.c.l.b16 %v337
        %v402 = vunpack.c.l.b16 %v338
        %v403 = vunpack.c.l.b16 %v339
        %v404 = vunpack.c.l.b16 %v340
        %v405 = vunpack.c.l.b16 %v341
        %v406 = vunpack.c.l.b16 %v342
        %v407 = vunpack.c.l.b16 %v343
        %v408 = vunpack.c.l.b16 %v344
        %v409 = vunpack.c.l.b16 %v345
        %v410 = vunpack.c.l.b16 %v346
        %v411 = vunpack.c.l.b16 %v347
        %v412 = vunpack.c.l.b16 %v348
        %v413 = vunpack.c.l.b16 %v349
        %v414 = vunpack.c.l.b16 %v350
        %v415 = vunpack.c.l.b16 %v351
        %v416 = vunpack.c.l.b16 %v352
        %v417 = vpack.c.b16 %v386, %v385
        %v418 = vpack.c.b16 %v388, %v387
        %v419 = vpack.c.b16 %v390, %v389
        %v420 = vpack.c.b16 %v392, %v391
        %v421 = vpack.c.b16 %v394, %v393
        %v422 = vpack.c.b16 %v396, %v395
        %v423 = vpack.c.b16 %v398, %v397
        %v424 = vpack.c.b16 %v400, %v399
        %v425 = vpack.c.b16 %v402, %v401
        %v426 = vpack.c.b16 %v404, %v403
        %v427 = vpack.c.b16 %v406, %v405
        %v428 = vpack.c.b16 %v408, %v407
        %v429 = vpack.c.b16 %v410, %v409
        %v430 = vpack.c.b16 %v412, %v411
        %v431 = vpack.c.b16 %v414, %v413
        %v432 = vpack.c.b16 %v416, %v415
        %v465 = vunpack.c.l.b16 %v305
        %v466 = vunpack.c.l.b16 %v306
        %v467 = vunpack.c.l.b16 %v307
        %v468 = vunpack.c.l.b16 %v308
        %v469 = vunpack.c.l.b16 %v309
        %v470 = vunpack.c.l.b16 %v310
        %v471 = vunpack.c.l.b16 %v311
        %v472 = vunpack.c.l.b16 %v312
        %v473 = vunpack.c.l.b16 %v313
        %v474 = vunpack.c.l.b16 %v314
        %v475 = vunpack.c.l.b16 %v315
        %v476 = vunpack.c.l.b16 %v316
        %v477 = vunpack.c.l.b16 %v317
        %v478 = vunpack.c.l.b16 %v318
        %v479 = vunpack.c.l.b16 %v319
        %v480 = vunpack.c.l.b16 %v320
        %v481 = vpack.c.b16 %v466, %v465
        %v482 = vpack.c.b16 %v468, %v467
        %v483 = vpack.c.b16 %v470, %v469
        %v484 = vpack.c.b16 %v472, %v471
        %v485 = vpack.c.b16 %v474, %v473
        %v486 = vpack.c.b16 %v476, %v475
        %v487 = vpack.c.b16 %v478, %v477
        %v488 = vpack.c.b16 %v480, %v479
        %497 = vmatprep.subr.bf16.mxu0 0
        %498 = vmatpush1.bf16.msra.mxu0 %v481
        %499 = vmatprep.subr.bf16.mxu0 0
        %500 = vmatpush1.bf16.msra.mxu0 %v482
        %501 = vmatprep.subr.bf16.mxu0 0
        %502 = vmatpush1.bf16.msra.mxu0 %v483
        %503 = vmatprep.subr.bf16.mxu0 0
        %504 = vmatpush1.bf16.msra.mxu0 %v484
        %505 = vmatprep.subr.bf16.mxu0 0
        %506 = vmatpush1.bf16.msra.mxu0 %v485
        %507 = vmatprep.subr.bf16.mxu0 0
        %508 = vmatpush1.bf16.msra.mxu0 %v486
        %509 = vmatprep.subr.bf16.mxu0 0
        %510 = vmatpush1.bf16.msra.mxu0 %v487
        %511 = vmatprep.subr.bf16.mxu0 0
        %512 = vmatpush1.bf16.msra.mxu0 %v488
        %513 = vmatprep.subr.bf16.mxu0 0
        %514 = vmatpush1.bf16.msra.mxu0 0
        %515 = vmatprep.subr.bf16.mxu0 0
        %516 = vmatpush1.bf16.msra.mxu0 0
        %517 = vmatprep.subr.bf16.mxu0 0
        %518 = vmatpush1.bf16.msra.mxu0 0
        %519 = vmatprep.subr.bf16.mxu0 0
        %520 = vmatpush1.bf16.msra.mxu0 0
        %521 = vmatprep.subr.bf16.mxu0 0
        %522 = vmatpush1.bf16.msra.mxu0 0
        %523 = vmatprep.subr.bf16.mxu0 0
        %524 = vmatpush1.bf16.msra.mxu0 0
        %525 = vmatprep.subr.bf16.mxu0 0
        %526 = vmatpush1.bf16.msra.mxu0 0
        %527 = vmatprep.subr.bf16.mxu0 0
        %528 = vmatpush1.bf16.msra.mxu0 0
        %529 = vmatprep.mubr.bf16.mxu0 0
        %530 = vmatmul.mubr.bf16.gmra.mrb[0].mxu0 %v417
        %v531 = vpop.f32.mrb[0].mxu0
        %v532 = vadd.f32 0.0, %v531
        %v533 = vpop.f32.mrb[0].mxu0
        %v534 = vpop.f32.mrb[0].mxu0
        %v535 = vadd.f32 0.0, %v534
        %v536 = vpop.f32.mrb[0].mxu0
        %537 = vmatprep.mubr.bf16.mxu0 0
        %538 = vmatmul.mubr.bf16.gmra.mrb[0].mxu0 %v418
        %v539 = vpop.f32.mrb[0].mxu0
        %v540 = vadd.f32 0.0, %v539
        %v541 = vpop.f32.mrb[0].mxu0
        %v542 = vpop.f32.mrb[0].mxu0
        %v543 = vadd.f32 0.0, %v542
        %v544 = vpop.f32.mrb[0].mxu0
        %545 = vmatprep.mubr.bf16.mxu0 0
        %546 = vmatmul.mubr.bf16.gmra.mrb[0].mxu0 %v419
        %v547 = vpop.f32.mrb[0].mxu0
        %v548 = vadd.f32 0.0, %v547
        %v549 = vpop.f32.mrb[0].mxu0
        %v550 = vpop.f32.mrb[0].mxu0
        %v551 = vadd.f32 0.0, %v550
        %v552 = vpop.f32.mrb[0].mxu0
        %553 = vmatprep.mubr.bf16.mxu0 0
        %554 = vmatmul.mubr.bf16.gmra.mrb[0].mxu0 %v420
        %v555 = vpop.f32.mrb[0].mxu0
        %v556 = vadd.f32 0.0, %v555
        %v557 = vpop.f32.mrb[0].mxu0
        %v558 = vpop.f32.mrb[0].mxu0
        %v559 = vadd.f32 0.0, %v558
        %v560 = vpop.f32.mrb[0].mxu0
        %561 = vmatprep.mubr.bf16.mxu0 0
        %562 = vmatmul.mubr.bf16.gmra.mrb[0].mxu0 %v421
        %v563 = vpop.f32.mrb[0].mxu0
        %v564 = vadd.f32 0.0, %v563
        %v565 = vpop.f32.mrb[0].mxu0
        %v566 = vpop.f32.mrb[0].mxu0
        %v567 = vadd.f32 0.0, %v566
        %v568 = vpop.f32.mrb[0].mxu0
        %569 = vmatprep.mubr.bf16.mxu0 0
        %570 = vmatmul.mubr.bf16.gmra.mrb[0].mxu0 %v422
        %v571 = vpop.f32.mrb[0].mxu0
        %v572 = vadd.f32 0.0, %v571
        %v573 = vpop.f32.mrb[0].mxu0
        %v574 = vpop.f32.mrb[0].mxu0
        %v575 = vadd.f32 0.0, %v574
        %v576 = vpop.f32.mrb[0].mxu0
        %577 = vmatprep.mubr.bf16.mxu0 0
        %578 = vmatmul.mubr.bf16.gmra.mrb[0].mxu0 %v423
        %v579 = vpop.f32.mrb[0].mxu0
        %v580 = vadd.f32 0.0, %v579
        %v581 = vpop.f32.mrb[0].mxu0
        %v582 = vpop.f32.mrb[0].mxu0
        %v583 = vadd.f32 0.0, %v582
        %v584 = vpop.f32.mrb[0].mxu0
        %585 = vmatprep.mubr.bf16.mxu0 0
        %586 = vmatmul.mubr.bf16.gmra.mrb[0].mxu0 %v424
        %v587 = vpop.f32.mrb[0].mxu0
        %v588 = vadd.f32 0.0, %v587
        %v589 = vpop.f32.mrb[0].mxu0
        %v590 = vpop.f32.mrb[0].mxu0
        %v591 = vadd.f32 0.0, %v590
        %v592 = vpop.f32.mrb[0].mxu0
        %593 = vmatprep.mubr.bf16.mxu0 0
        %594 = vmatmul.mubr.bf16.gmra.mrb[0].mxu0 %v425
        %v595 = vpop.f32.mrb[0].mxu0
        %v596 = vadd.f32 0.0, %v595
        %v597 = vpop.f32.mrb[0].mxu0
        %v598 = vpop.f32.mrb[0].mxu0
        %v599 = vadd.f32 0.0, %v598
        %v600 = vpop.f32.mrb[0].mxu0
        %601 = vmatprep.mubr.bf16.mxu0 0
        %602 = vmatmul.mubr.bf16.gmra.mrb[0].mxu0 %v426
        %v603 = vpop.f32.mrb[0].mxu0
        %v604 = vadd.f32 0.0, %v603
        %v605 = vpop.f32.mrb[0].mxu0
        %v606 = vpop.f32.mrb[0].mxu0
        %v607 = vadd.f32 0.0, %v606
        %v608 = vpop.f32.mrb[0].mxu0
        %609 = vmatprep.mubr.bf16.mxu0 0
        %610 = vmatmul.mubr.bf16.gmra.mrb[0].mxu0 %v427
        %v611 = vpop.f32.mrb[0].mxu0
        %v612 = vadd.f32 0.0, %v611
        %v613 = vpop.f32.mrb[0].mxu0
        %v614 = vpop.f32.mrb[0].mxu0
        %v615 = vadd.f32 0.0, %v614
        %v616 = vpop.f32.mrb[0].mxu0
        %617 = vmatprep.mubr.bf16.mxu0 0
        %618 = vmatmul.mubr.bf16.gmra.mrb[0].mxu0 %v428
        %v619 = vpop.f32.mrb[0].mxu0
        %v620 = vadd.f32 0.0, %v619
        %v621 = vpop.f32.mrb[0].mxu0
        %v622 = vpop.f32.mrb[0].mxu0
        %v623 = vadd.f32 0.0, %v622
        %v624 = vpop.f32.mrb[0].mxu0
        %625 = vmatprep.mubr.bf16.mxu0 0
        %626 = vmatmul.mubr.bf16.gmra.mrb[0].mxu0 %v429
        %v627 = vpop.f32.mrb[0].mxu0
        %v628 = vadd.f32 0.0, %v627
        %v629 = vpop.f32.mrb[0].mxu0
        %v630 = vpop.f32.mrb[0].mxu0
        %v631 = vadd.f32 0.0, %v630
        %v632 = vpop.f32.mrb[0].mxu0
        %633 = vmatprep.mubr.bf16.mxu0 0
        %634 = vmatmul.mubr.bf16.gmra.mrb[0].mxu0 %v430
        %v635 = vpop.f32.mrb[0].mxu0
        %v636 = vadd.f32 0.0, %v635
        %v637 = vpop.f32.mrb[0].mxu0
        %v638 = vpop.f32.mrb[0].mxu0
        %v639 = vadd.f32 0.0, %v638
        %v640 = vpop.f32.mrb[0].mxu0
        %641 = vmatprep.mubr.bf16.mxu0 0
        %642 = vmatmul.mubr.bf16.gmra.mrb[0].mxu0 %v431
        %v643 = vpop.f32.mrb[0].mxu0
        %v644 = vadd.f32 0.0, %v643
        %v645 = vpop.f32.mrb[0].mxu0
        %v646 = vpop.f32.mrb[0].mxu0
        %v647 = vadd.f32 0.0, %v646
        %v648 = vpop.f32.mrb[0].mxu0
        %649 = vmatprep.mubr.bf16.mxu0 0
        %650 = vmatmul.mubr.bf16.gmra.mrb[0].mxu0 %v432
        %v651 = vpop.f32.mrb[0].mxu0
        %v652 = vadd.f32 0.0, %v651
        %v653 = vpop.f32.mrb[0].mxu0
        %v654 = vpop.f32.mrb[0].mxu0
        %v655 = vadd.f32 0.0, %v654
        %v656 = vpop.f32.mrb[0].mxu0
        %657 = vdwg.mxu0
        %v658 = vpack.c.bf16 %v535, %v532
        %v659 = vpack.c.bf16 %v543, %v540
        %v660 = vpack.c.bf16 %v551, %v548
        %v661 = vpack.c.bf16 %v559, %v556
        %v662 = vpack.c.bf16 %v567, %v564
        %v663 = vpack.c.bf16 %v575, %v572
        %v664 = vpack.c.bf16 %v583, %v580
        %v665 = vpack.c.bf16 %v591, %v588
        %v666 = vld [vmem:[#allocation5] sm:$0xf]
        %v667 = vld [vmem:[#allocation5 + $0x4] sm:$0xf]
        %v668 = vld [vmem:[#allocation5 + $0x8] sm:$0xf]
        %v669 = vld [vmem:[#allocation5 + $0xc] sm:$0xf]
        %v670 = vld [vmem:[#allocation5 + $0x10] sm:$0xf]
        %v671 = vld [vmem:[#allocation5 + $0x14] sm:$0xf]
        %v672 = vld [vmem:[#allocation5 + $0x18] sm:$0xf]
        %v673 = vld [vmem:[#allocation5 + $0x1c] sm:$0xf]
        %v674 = vld [vmem:[#allocation5 + $0x20] sm:$0xf]
        %v675 = vld [vmem:[#allocation5 + $0x24] sm:$0xf]
        %v676 = vld [vmem:[#allocation5 + $0x28] sm:$0xf]
        %v677 = vld [vmem:[#allocation5 + $0x2c] sm:$0xf]
        %v678 = vld [vmem:[#allocation5 + $0x30] sm:$0xf]
        %v679 = vld [vmem:[#allocation5 + $0x34] sm:$0xf]
        %v680 = vld [vmem:[#allocation5 + $0x38] sm:$0xf]
        %v681 = vld [vmem:[#allocation5 + $0x3c] sm:$0xf]
        %v698 = vunpack.c.l.b16 %v666
        %v699 = vunpack.c.l.b16 %v667
        %v700 = vunpack.c.l.b16 %v668
        %v701 = vunpack.c.l.b16 %v669
        %v702 = vunpack.c.l.b16 %v670
        %v703 = vunpack.c.l.b16 %v671
        %v704 = vunpack.c.l.b16 %v672
        %v705 = vunpack.c.l.b16 %v673
        %v706 = vunpack.c.l.b16 %v674
        %v707 = vunpack.c.l.b16 %v675
        %v708 = vunpack.c.l.b16 %v676
        %v709 = vunpack.c.l.b16 %v677
        %v710 = vunpack.c.l.b16 %v678
        %v711 = vunpack.c.l.b16 %v679
        %v712 = vunpack.c.l.b16 %v680
        %v713 = vunpack.c.l.b16 %v681
        %v714 = vpack.c.b16 %v699, %v698
        %v715 = vpack.c.b16 %v701, %v700
        %v716 = vpack.c.b16 %v703, %v702
        %v717 = vpack.c.b16 %v705, %v704
        %v718 = vpack.c.b16 %v707, %v706
        %v719 = vpack.c.b16 %v709, %v708
        %v720 = vpack.c.b16 %v711, %v710
        %v721 = vpack.c.b16 %v713, %v712
        %730 = vmatprep.subr.bf16.mxu0 0
        %731 = vmatpush1.bf16.msra.mxu0 %v714
        %732 = vmatprep.subr.bf16.mxu0 0
        %733 = vmatpush1.bf16.msra.mxu0 %v715
        %734 = vmatprep.subr.bf16.mxu0 0
        %735 = vmatpush1.bf16.msra.mxu0 %v716
        %736 = vmatprep.subr.bf16.mxu0 0
        %737 = vmatpush1.bf16.msra.mxu0 %v717
        %738 = vmatprep.subr.bf16.mxu0 0
        %739 = vmatpush1.bf16.msra.mxu0 %v718
        %740 = vmatprep.subr.bf16.mxu0 0
        %741 = vmatpush1.bf16.msra.mxu0 %v719
        %742 = vmatprep.subr.bf16.mxu0 0
        %743 = vmatpush1.bf16.msra.mxu0 %v720
        %744 = vmatprep.subr.bf16.mxu0 0
        %745 = vmatpush1.bf16.msra.mxu0 %v721
        %746 = vmatprep.subr.bf16.mxu0 0
        %747 = vmatpush1.bf16.msra.mxu0 0
        %748 = vmatprep.subr.bf16.mxu0 0
        %749 = vmatpush1.bf16.msra.mxu0 0
        %750 = vmatprep.subr.bf16.mxu0 0
        %751 = vmatpush1.bf16.msra.mxu0 0
        %752 = vmatprep.subr.bf16.mxu0 0
        %753 = vmatpush1.bf16.msra.mxu0 0
        %754 = vmatprep.subr.bf16.mxu0 0
        %755 = vmatpush1.bf16.msra.mxu0 0
        %756 = vmatprep.subr.bf16.mxu0 0
        %757 = vmatpush1.bf16.msra.mxu0 0
        %758 = vmatprep.subr.bf16.mxu0 0
        %759 = vmatpush1.bf16.msra.mxu0 0
        %760 = vmatprep.subr.bf16.mxu0 0
        %761 = vmatpush1.bf16.msra.mxu0 0
        %762 = vmatprep.mubr.bf16.mxu0 0
        %763 = vmatmul.mubr.bf16.gmra.mrb[0].mxu0 %v658
        %v764 = vpop.f32.mrb[0].mxu0
        %v765 = vadd.f32 %v596, %v764
        %v766 = vpop.f32.mrb[0].mxu0
        %v767 = vpop.f32.mrb[0].mxu0
        %v768 = vadd.f32 %v599, %v767
        %v769 = vpop.f32.mrb[0].mxu0
        %770 = vmatprep.mubr.bf16.mxu0 0
        %771 = vmatmul.mubr.bf16.gmra.mrb[0].mxu0 %v659
        %v772 = vpop.f32.mrb[0].mxu0
        %v773 = vadd.f32 %v604, %v772
        %v774 = vpop.f32.mrb[0].mxu0
        %v775 = vpop.f32.mrb[0].mxu0
        %v776 = vadd.f32 %v607, %v775
        %v777 = vpop.f32.mrb[0].mxu0
        %778 = vmatprep.mubr.bf16.mxu0 0
        %779 = vmatmul.mubr.bf16.gmra.mrb[0].mxu0 %v660
        %v780 = vpop.f32.mrb[0].mxu0
        %v781 = vadd.f32 %v612, %v780
        %v782 = vpop.f32.mrb[0].mxu0
        %v783 = vpop.f32.mrb[0].mxu0
        %v784 = vadd.f32 %v615, %v783
        %v785 = vpop.f32.mrb[0].mxu0
        %786 = vmatprep.mubr.bf16.mxu0 0
        %787 = vmatmul.mubr.bf16.gmra.mrb[0].mxu0 %v661
        %v788 = vpop.f32.mrb[0].mxu0
        %v789 = vadd.f32 %v620, %v788
        %v790 = vpop.f32.mrb[0].mxu0
        %v791 = vpop.f32.mrb[0].mxu0
        %v792 = vadd.f32 %v623, %v791
        %v793 = vpop.f32.mrb[0].mxu0
        %794 = vmatprep.mubr.bf16.mxu0 0
        %795 = vmatmul.mubr.bf16.gmra.mrb[0].mxu0 %v662
        %v796 = vpop.f32.mrb[0].mxu0
        %v797 = vadd.f32 %v628, %v796
        %v798 = vpop.f32.mrb[0].mxu0
        %v799 = vpop.f32.mrb[0].mxu0
        %v800 = vadd.f32 %v631, %v799
        %v801 = vpop.f32.mrb[0].mxu0
        %802 = vmatprep.mubr.bf16.mxu0 0
        %803 = vmatmul.mubr.bf16.gmra.mrb[0].mxu0 %v663
        %v804 = vpop.f32.mrb[0].mxu0
        %v805 = vadd.f32 %v636, %v804
        %v806 = vpop.f32.mrb[0].mxu0
        %v807 = vpop.f32.mrb[0].mxu0
        %v808 = vadd.f32 %v639, %v807
        %v809 = vpop.f32.mrb[0].mxu0
        %810 = vmatprep.mubr.bf16.mxu0 0
        %811 = vmatmul.mubr.bf16.gmra.mrb[0].mxu0 %v664
        %v812 = vpop.f32.mrb[0].mxu0
        %v813 = vadd.f32 %v644, %v812
        %v814 = vpop.f32.mrb[0].mxu0
        %v815 = vpop.f32.mrb[0].mxu0
        %v816 = vadd.f32 %v647, %v815
        %v817 = vpop.f32.mrb[0].mxu0
        %818 = vmatprep.mubr.bf16.mxu0 0
        %819 = vmatmul.mubr.bf16.gmra.mrb[0].mxu0 %v665
        %v820 = vpop.f32.mrb[0].mxu0
        %v821 = vadd.f32 %v652, %v820
        %v822 = vpop.f32.mrb[0].mxu0
        %v823 = vpop.f32.mrb[0].mxu0
        %v824 = vadd.f32 %v655, %v823
        %v825 = vpop.f32.mrb[0].mxu0
        %826 = vdwg.mxu0
        %v827 = vld [vmem:[%s243] sm:$0xff]
        %v828 = vld [vmem:[%s243 + $0x8] sm:$0xff]
        %v829 = vld [vmem:[%s243 + $0x10] sm:$0xff]
        %v830 = vld [vmem:[%s243 + $0x18] sm:$0xff]
        %v831 = vld [vmem:[%s243 + $0x20] sm:$0xff]
        %v832 = vld [vmem:[%s243 + $0x28] sm:$0xff]
        %v833 = vld [vmem:[%s243 + $0x30] sm:$0xff]
        %v834 = vld [vmem:[%s243 + $0x38] sm:$0xff]
        %v835 = vld [vmem:[%s243 + $0x40] sm:$0xff]
        %v836 = vld [vmem:[%s243 + $0x48] sm:$0xff]
        %v837 = vld [vmem:[%s243 + $0x50] sm:$0xff]
        %v838 = vld [vmem:[%s243 + $0x58] sm:$0xff]
        %v839 = vld [vmem:[%s243 + $0x60] sm:$0xff]
        %v840 = vld [vmem:[%s243 + $0x68] sm:$0xff]
        %v841 = vld [vmem:[%s243 + $0x70] sm:$0xff]
        %v842 = vld [vmem:[%s243 + $0x78] sm:$0xff]
        %844 = vset.pattern.permute.xlu0 0
        %845 = vperm.xlu0 %844, %v827
        %v846 = vpop.permute.xlu0 %845
        %849 = vset.pattern.permute.xlu0 0
        %850 = vperm.xlu0 %849, %v828
        %v851 = vpop.permute.xlu0 %850
        %854 = vset.pattern.permute.xlu0 0
        %855 = vperm.xlu0 %854, %v829
        %v856 = vpop.permute.xlu0 %855
        %859 = vset.pattern.permute.xlu0 0
        %860 = vperm.xlu0 %859, %v830
        %v861 = vpop.permute.xlu0 %860
        %864 = vset.pattern.permute.xlu0 0
        %865 = vperm.xlu0 %864, %v831
        %v866 = vpop.permute.xlu0 %865
        %869 = vset.pattern.permute.xlu0 0
        %870 = vperm.xlu0 %869, %v832
        %v871 = vpop.permute.xlu0 %870
        %874 = vset.pattern.permute.xlu0 0
        %875 = vperm.xlu0 %874, %v833
        %v876 = vpop.permute.xlu0 %875
        %879 = vset.pattern.permute.xlu0 0
        %880 = vperm.xlu0 %879, %v834
        %v881 = vpop.permute.xlu0 %880
        %884 = vset.pattern.permute.xlu0 0
        %885 = vperm.xlu0 %884, %v835
        %v886 = vpop.permute.xlu0 %885
        %889 = vset.pattern.permute.xlu0 0
        %890 = vperm.xlu0 %889, %v836
        %v891 = vpop.permute.xlu0 %890
        %894 = vset.pattern.permute.xlu0 0
        %895 = vperm.xlu0 %894, %v837
        %v896 = vpop.permute.xlu0 %895
        %899 = vset.pattern.permute.xlu0 0
        %900 = vperm.xlu0 %899, %v838
        %v901 = vpop.permute.xlu0 %900
        %904 = vset.pattern.permute.xlu0 0
        %905 = vperm.xlu0 %904, %v839
        %v906 = vpop.permute.xlu0 %905
        %909 = vset.pattern.permute.xlu0 0
        %910 = vperm.xlu0 %909, %v840
        %v911 = vpop.permute.xlu0 %910
        %914 = vset.pattern.permute.xlu0 0
        %915 = vperm.xlu0 %914, %v841
        %v916 = vpop.permute.xlu0 %915
        %919 = vset.pattern.permute.xlu0 0
        %920 = vperm.xlu0 %919, %v842
        %v921 = vpop.permute.xlu0 %920
        %v923 = vadd.f32 %v765, %v846
        %v924 = vadd.f32 %v768, %v851
        %v925 = vadd.f32 %v773, %v856
        %v926 = vadd.f32 %v776, %v861
        %v927 = vadd.f32 %v781, %v866
        %v928 = vadd.f32 %v784, %v871
        %v929 = vadd.f32 %v789, %v876
        %v930 = vadd.f32 %v792, %v881
        %v931 = vadd.f32 %v797, %v886
        %v932 = vadd.f32 %v800, %v891
        %v933 = vadd.f32 %v805, %v896
        %v934 = vadd.f32 %v808, %v901
        %v935 = vadd.f32 %v813, %v906
        %v936 = vadd.f32 %v816, %v911
        %v937 = vadd.f32 %v821, %v916
        %v938 = vadd.f32 %v824, %v921
        %v939 = vmax.f32 %v923, 0.0
        %v940 = vmax.f32 %v924, 0.0
        %v941 = vmax.f32 %v925, 0.0
        %v942 = vmax.f32 %v926, 0.0
        %v943 = vmax.f32 %v927, 0.0
        %v944 = vmax.f32 %v928, 0.0
        %v945 = vmax.f32 %v929, 0.0
        %v946 = vmax.f32 %v930, 0.0
        %v947 = vmax.f32 %v931, 0.0
        %v948 = vmax.f32 %v932, 0.0
        %v949 = vmax.f32 %v933, 0.0
        %v950 = vmax.f32 %v934, 0.0
        %v951 = vmax.f32 %v935, 0.0
        %v952 = vmax.f32 %v936, 0.0
        %v953 = vmax.f32 %v937, 0.0
        %v954 = vmax.f32 %v938, 0.0
        %v955 = vpack.c.bf16 %v940, %v939
        %v956 = vpack.c.bf16 %v942, %v941
        %v957 = vpack.c.bf16 %v944, %v943
        %v958 = vpack.c.bf16 %v946, %v945
        %v959 = vpack.c.bf16 %v948, %v947
        %v960 = vpack.c.bf16 %v950, %v949
        %v961 = vpack.c.bf16 %v952, %v951
        %v962 = vpack.c.bf16 %v954, %v953
        %v971 = vunpack.c.l.b16 %v955
        %v972 = vunpack.c.h.b16 %v955
        %v973 = vunpack.c.l.b16 %v956
        %v974 = vunpack.c.h.b16 %v956
        %v975 = vunpack.c.l.b16 %v957
        %v976 = vunpack.c.h.b16 %v957
        %v977 = vunpack.c.l.b16 %v958
        %v978 = vunpack.c.h.b16 %v958
        %v979 = vunpack.c.l.b16 %v959
        %v980 = vunpack.c.h.b16 %v959
        %v981 = vunpack.c.l.b16 %v960
        %v982 = vunpack.c.h.b16 %v960
        %v983 = vunpack.c.l.b16 %v961
        %v984 = vunpack.c.h.b16 %v961
        %v985 = vunpack.c.l.b16 %v962
        %v986 = vunpack.c.h.b16 %v962
        %v987 = vpack.c.b16 %v971, %v971
        %v988 = vpack.c.b16 %v972, %v972
        %v989 = vpack.c.b16 %v973, %v973
        %v990 = vpack.c.b16 %v974, %v974
        %v991 = vpack.c.b16 %v975, %v975
        %v992 = vpack.c.b16 %v976, %v976
        %v993 = vpack.c.b16 %v977, %v977
        %v994 = vpack.c.b16 %v978, %v978
        %v995 = vpack.c.b16 %v979, %v979
        %v996 = vpack.c.b16 %v980, %v980
        %v997 = vpack.c.b16 %v981, %v981
        %v998 = vpack.c.b16 %v982, %v982
        %v999 = vpack.c.b16 %v983, %v983
        %v1000 = vpack.c.b16 %v984, %v984
        %v1001 = vpack.c.b16 %v985, %v985
        %v1002 = vpack.c.b16 %v986, %v986
        %1019 = vst [vmem:[#allocation9] sm:$0xf] %v987
        %1020 = vst [vmem:[#allocation9 + $0x4] sm:$0xf] %v988
        %1021 = vst [vmem:[#allocation9 + $0x8] sm:$0xf] %v989
        %1022 = vst [vmem:[#allocation9 + $0xc] sm:$0xf] %v990
        %1023 = vst [vmem:[#allocation9 + $0x10] sm:$0xf] %v991
        %1024 = vst [vmem:[#allocation9 + $0x14] sm:$0xf] %v992
        %1025 = vst [vmem:[#allocation9 + $0x18] sm:$0xf] %v993
        %1026 = vst [vmem:[#allocation9 + $0x1c] sm:$0xf] %v994
        %1027 = vst [vmem:[#allocation9 + $0x20] sm:$0xf] %v995
        %1028 = vst [vmem:[#allocation9 + $0x24] sm:$0xf] %v996
        %1029 = vst [vmem:[#allocation9 + $0x28] sm:$0xf] %v997
        %1030 = vst [vmem:[#allocation9 + $0x2c] sm:$0xf] %v998
        %1031 = vst [vmem:[#allocation9 + $0x30] sm:$0xf] %v999
        %1032 = vst [vmem:[#allocation9 + $0x34] sm:$0xf] %v1000
        %1033 = vst [vmem:[#allocation9 + $0x38] sm:$0xf] %v1001
        %1034 = vst [vmem:[#allocation9 + $0x3c] sm:$0xf] %v1002
        // Predicated region
        $region57: #{tpu_custom_call.1} parent=35 // pred_check
          %p1035 = pneg %p125
        $region58: #{tpu_custom_call.1} parent=35 // pred_check_branch
          %1037 = sbr.rel (%p1035) target = $region60
        $region59: #{tpu_custom_call.1} parent=35 // pred_region
          %s1039 = ssub.s32 1024, 1024
          %1040 = vsyncadd [#allocation4], %s1039
          %s1041 = sshll.u32 [#allocation9], 4
          %s1042 = int_to_ptr.vmem [resolvable:$true] %s1041
          %1047 = dma.vmem_to_hbm [thread:$0]  %s1042, 1024, %s4, [#allocation4], 64, 64, 4
        $region60: #{tpu_custom_call.1} parent=35 // pred_fallthru
          _
        // Predicated region
        $region61: #{tpu_custom_call.1} parent=35 // pred_check
          %p1048 = pneg %p125
        $region62: #{tpu_custom_call.1} parent=35 // pred_check_branch
          %1050 = sbr.rel (%p1048) target = $region64
        $region63: #{tpu_custom_call.1} parent=35 // pred_region
          %1051 = dma.done [#allocation4], 1024
        $region64: #{tpu_custom_call.1} parent=35 // pred_fallthru
          _
      $region36: #{tpu_custom_call.1} parent=5 // pred_fallthru
        _
      %p1052 = scmp.le.s32.totalorder 2, %s13
      // Predicated region
      $region65: #{tpu_custom_call.1} parent=5 // pred_check
        %p1053 = pneg %p1052
      $region66: #{tpu_custom_call.1} parent=5 // pred_check_branch
        %1055 = sbr.rel (%p1053) target = $region68
      $region67: #{tpu_custom_call.1} parent=5 // pred_region
        %s1056 = ssub.s32 %s13, 2
      $region68: #{tpu_custom_call.1} parent=5 // pred_fallthru
        _
    $region6: #{tpu_custom_call.1} parent=1 // loop_footer
      %s17 = sadd.s32 1, %s13
    $region7: #{tpu_custom_call.1} parent=1 // loop_footer_branch
      %12 = sbr.rel target = $region3
    $region8: #{tpu_custom_call.1} parent=1 // loop_exit
      _
    %1057 = vsyncpa [#allocation3], 1
    %s1058 = scalar_lea.sflag [#allocation3], 1
    %1059 = vsyncpa %s1058, 1
    %1060 = vsyncpa [#allocation6], 1
    %1061 = vsyncpa [#allocation4], 1
    %s1062 = scalar_lea.sflag [#allocation4], 1
    %1063 = vsyncpa %s1062, 1

</llo_original>
